<compile_context>
chip_gen: v5e
topology: v5e:2x2
jax: 0.10.0
libtpu: 0.0.40
codegen_flags: <defaults>
</compile_context>

<pallas_src>
import functools

import jax
import jax.numpy as jnp
from jax.experimental import pallas as pl
from jax.experimental.pallas import tpu as pltpu


def _lstm_net_kernel(x_ref, wih_ref, whh_ref, b_ref, wout_ref, bout_ref,
                     out_ref, seq_buf, *, seq_len, hidden, num_layer):
    H = hidden
    cdt = whh_ref.dtype                       # matmul input dtype (f32 or bf16)

    seq = x_ref[...]                          # (S, H) layer-0 input (zero-padded to H)
    for layer in range(num_layer):            # static, unrolled layer loop
        wih = wih_ref[layer]                  # (H, 4H)
        whh = whh_ref[layer]                  # (H, 4H)
        b = b_ref[layer:layer + 1, :]         # (1, 4H) = b_ih + b_hh

        # Hoisted input-to-hidden matmul + bias: one (S,H)@(H,4H) MXU call
        # instead of a tiny matmul + bias broadcast per time step.
        gates_x = jnp.dot(seq.astype(cdt), wih,
                          preferred_element_type=jnp.float32) + b      # (S, 4H)

        # h / c stay in vregs (Python loop carries); time loop fully unrolled.
        h = jnp.zeros((1, H), jnp.float32)
        c = jnp.zeros((1, H), jnp.float32)
        for t in range(seq_len):
            gates = gates_x[t:t + 1, :] + jnp.dot(
                h.astype(cdt), whh, preferred_element_type=jnp.float32)  # (1, 4H)
            i = jax.nn.sigmoid(gates[:, 0 * H:1 * H])
            f = jax.nn.sigmoid(gates[:, 1 * H:2 * H])
            g = jnp.tanh(gates[:, 2 * H:3 * H])
            o = jax.nn.sigmoid(gates[:, 3 * H:4 * H])
            c = f * c + i * g
            h = o * jnp.tanh(c)
            seq_buf[pl.ds(t, 1), :] = h       # off the critical path; next layer's input
        seq = seq_buf[...]                    # (S, H)

    # Final projection into a lane-dense (S, O_pad) slab (O padded to 128).
    out_ref[...] = (jnp.dot(seq, wout_ref[...],
                            preferred_element_type=jnp.float32)
                    + bout_ref[...])


def make_params(key, input_size, hidden_size, output_size, num_layer):
    """PyTorch-style uniform(-1/sqrt(H), 1/sqrt(H)) init, deterministic."""
    H = hidden_size
    k = 1.0 / float(jnp.sqrt(H))
    lstm = []
    for layer in range(num_layer):
        in_dim = input_size if layer == 0 else H
        key, k1, k2, k3, k4 = jax.random.split(key, 5)
        w_ih = jax.random.uniform(k1, (4 * H, in_dim), jnp.float32, -k, k)
        w_hh = jax.random.uniform(k2, (4 * H, H), jnp.float32, -k, k)
        b_ih = jax.random.uniform(k3, (4 * H,), jnp.float32, -k, k)
        b_hh = jax.random.uniform(k4, (4 * H,), jnp.float32, -k, k)
        lstm.append((w_ih, w_hh, b_ih, b_hh))
    key, k1, k2 = jax.random.split(key, 3)
    w_out = jax.random.uniform(k1, (output_size, H), jnp.float32, -k, k)
    b_out = jax.random.uniform(k2, (output_size,), jnp.float32, -k, k)
    return {"lstm": lstm, "out": (w_out, b_out)}


def net_forward(x, params, hidden_size, num_layer, use_bf16_matmul=False):
    S, B, I = x.shape
    H = hidden_size
    assert I <= H, "kernel packs layer-0 inputs into hidden-width lanes"
    w_out, b_out = params["out"]
    O = w_out.shape[0]
    O_pad = ((O + 127) // 128) * 128
    wdt = jnp.bfloat16 if use_bf16_matmul else jnp.float32

    # Pack LSTM weights as (L, H, 4H); layer-0 input weights zero-padded to H.
    wih_list, whh_list, b_list = [], [], []
    for (w_ih, w_hh, b_ih, b_hh) in params["lstm"]:
        w_ih_t = jnp.zeros((H, 4 * H), jnp.float32).at[:w_ih.shape[1], :].set(w_ih.T)
        wih_list.append(w_ih_t)
        whh_list.append(w_hh.T)
        b_list.append(b_ih + b_hh)
    wih = jnp.stack(wih_list).astype(wdt)        # (L, H, 4H)
    whh = jnp.stack(whh_list).astype(wdt)        # (L, H, 4H)
    b = jnp.stack(b_list)                        # (L, 4H)  f32
    wout = jnp.zeros((H, O_pad), jnp.float32).at[:, :O].set(w_out.T)   # lane-padded
    bout = jnp.zeros((1, O_pad), jnp.float32).at[:, :O].set(b_out[None, :])

    # out[:, -1, :] only ever sees batch row B-1, and LSTM batch rows are
    # independent -> prune the batch before the kernel (B -> 1, dim dropped).
    x_last = x[:, B - 1, :]                      # (S, I)
    x_pad = jnp.zeros((S, H), jnp.float32).at[:, :I].set(x_last)

    kernel = functools.partial(_lstm_net_kernel, seq_len=S, hidden=H,
                               num_layer=num_layer)
    out_padded = pl.pallas_call(
        kernel,
        out_shape=jax.ShapeDtypeStruct((S, O_pad), jnp.float32),
        in_specs=[pl.BlockSpec(memory_space=pltpu.MemorySpace.VMEM)] * 6,
        out_specs=pl.BlockSpec(memory_space=pltpu.MemorySpace.VMEM),
        scratch_shapes=[
            pltpu.VMEM((S, H), jnp.float32),     # per-layer hidden-state sequence
        ],
    )(x_pad, wih, whh, b, wout, bout)
    return out_padded[:, :O]


def net_forward_ref(x, params, hidden_size, num_layer):
    """Pure-JAX reference (exact PyTorch LSTM semantics) for validation."""
    S, B, I = x.shape
    H = hidden_size
    seq = x
    for (w_ih, w_hh, b_ih, b_hh) in params["lstm"]:
        h = jnp.zeros((B, H), jnp.float32)
        c = jnp.zeros((B, H), jnp.float32)
        outs = []
        for t in range(S):
            gates = seq[t] @ w_ih.T + h @ w_hh.T + b_ih + b_hh
            i = jax.nn.sigmoid(gates[:, 0 * H:1 * H])
            f = jax.nn.sigmoid(gates[:, 1 * H:2 * H])
            g = jnp.tanh(gates[:, 2 * H:3 * H])
            o = jax.nn.sigmoid(gates[:, 3 * H:4 * H])
            c = f * c + i * g
            h = o * jnp.tanh(c)
            outs.append(h)
        seq = jnp.stack(outs)
    w_out, b_out = params["out"]
    return seq[:, -1, :] @ w_out.T + b_out


if __name__ == "__main__":
    input_size, hidden_size, output_size, num_layer = 8, 32, 4, 2
    seq_len, batch = 8, 2

    key = jax.random.PRNGKey(0)
    key, pkey, xkey = jax.random.split(key, 3)
    params = make_params(pkey, input_size, hidden_size, output_size, num_layer)
    x = jax.random.normal(xkey, (seq_len, batch, input_size), jnp.float32)

    ref = net_forward_ref(x, params, hidden_size, num_layer)

    # f32 path (bit-comparable to the reference).
    out = jax.block_until_ready(net_forward(x, params, hidden_size, num_layer))
    assert out.shape == (seq_len, output_size)
    assert jnp.allclose(out, ref, atol=1e-4, rtol=1e-4), "f32 mismatch vs reference"

    # Optional bf16-weight MXU path (f32 accumulate); looser tolerance by design.
    out_bf16 = jax.block_until_ready(
        net_forward(x, params, hidden_size, num_layer, use_bf16_matmul=True))
    assert jnp.allclose(out_bf16, ref, atol=3e-2, rtol=3e-2), "bf16 mismatch vs reference"

    print("KERNEL_OK")
</pallas_src>

<mosaic_0001>
module attributes {stable_mosaic.version = 11 : i64} {
  func.func @_lstm_net_kernel(%arg0: memref<8x32xf32, #tpu.memory_space<vmem>>, %arg1: memref<2x32x128xf32, #tpu.memory_space<vmem>>, %arg2: memref<2x32x128xf32, #tpu.memory_space<vmem>>, %arg3: memref<2x128xf32, #tpu.memory_space<vmem>>, %arg4: memref<32x128xf32, #tpu.memory_space<vmem>>, %arg5: memref<1x128xf32, #tpu.memory_space<vmem>>, %arg6: memref<8x128xf32, #tpu.memory_space<vmem>>, %arg7: memref<8x32xf32, #tpu.memory_space<vmem>>) attributes {dimension_semantics = [], scalar_prefetch = 0 : i64, scratch_operands = 1 : i64, tpu.core_type = #tpu.core_type<tc>} {
    %c0 = arith.constant 0 : index
    %c0_0 = arith.constant 0 : index
    %0 = vector.load %arg0[%c0, %c0_0] : memref<8x32xf32, #tpu.memory_space<vmem>>, vector<8x32xf32>
    %c0_1 = arith.constant 0 : index
    %c0_2 = arith.constant 0 : index
    %c0_3 = arith.constant 0 : index
    %1 = vector.load %arg1[%c0_1, %c0_2, %c0_3] : memref<2x32x128xf32, #tpu.memory_space<vmem>>, vector<1x32x128xf32>
    %2 = vector.shape_cast %1 : vector<1x32x128xf32> to vector<32x128xf32>
    %c0_4 = arith.constant 0 : index
    %c0_5 = arith.constant 0 : index
    %c0_6 = arith.constant 0 : index
    %3 = vector.load %arg2[%c0_4, %c0_5, %c0_6] : memref<2x32x128xf32, #tpu.memory_space<vmem>>, vector<1x32x128xf32>
    %4 = vector.shape_cast %3 : vector<1x32x128xf32> to vector<32x128xf32>
    %c0_7 = arith.constant 0 : index
    %c0_8 = arith.constant 0 : index
    %5 = vector.load %arg3[%c0_7, %c0_8] : memref<2x128xf32, #tpu.memory_space<vmem>>, vector<1x128xf32>
    %cst = arith.constant dense<0.000000e+00> : vector<8x128xf32>
    %6 = tpu.matmul %0, %2, %cst {dimension_numbers = #tpu.dot_dimension_numbers<[1], [0], [0], [1], [0, 0, 1, 1], [], []>} : vector<8x32xf32>, vector<32x128xf32>, vector<8x128xf32> -> vector<8x128xf32>
    %7 = vector.broadcast %5 : vector<1x128xf32> to vector<8x128xf32>
    %8 = arith.addf %6, %7 : vector<8x128xf32>
    %cst_9 = arith.constant 0.000000e+00 : f32
    %9 = vector.broadcast %cst_9 : f32 to vector<1x32xf32>
    %cst_10 = arith.constant 0.000000e+00 : f32
    %10 = vector.broadcast %cst_10 : f32 to vector<1x32xf32>
    %11 = vector.extract_strided_slice %8 {offsets = [0, 0], sizes = [1, 128], strides = [1, 1]} : vector<8x128xf32> to vector<1x128xf32>
    %cst_11 = arith.constant dense<0.000000e+00> : vector<1x128xf32>
    %12 = tpu.matmul %9, %4, %cst_11 {dimension_numbers = #tpu.dot_dimension_numbers<[1], [0], [0], [1], [0, 0, 1, 1], [], []>} : vector<1x32xf32>, vector<32x128xf32>, vector<1x128xf32> -> vector<1x128xf32>
    %13 = arith.addf %11, %12 : vector<1x128xf32>
    %14 = vector.extract_strided_slice %13 {offsets = [0, 0], sizes = [1, 32], strides = [1, 1]} : vector<1x128xf32> to vector<1x32xf32>
    %15 = arith.negf %14 : vector<1x32xf32>
    %16 = math.exp %15 : vector<1x32xf32>
    %cst_12 = arith.constant 1.000000e+00 : f32
    %17 = vector.broadcast %cst_12 : f32 to vector<1x32xf32>
    %18 = arith.addf %17, %16 : vector<1x32xf32>
    %19 = arith.divf %17, %18 : vector<1x32xf32>
    %20 = vector.extract_strided_slice %13 {offsets = [0, 32], sizes = [1, 32], strides = [1, 1]} : vector<1x128xf32> to vector<1x32xf32>
    %21 = arith.negf %20 : vector<1x32xf32>
    %22 = math.exp %21 : vector<1x32xf32>
    %cst_13 = arith.constant 1.000000e+00 : f32
    %23 = vector.broadcast %cst_13 : f32 to vector<1x32xf32>
    %24 = arith.addf %23, %22 : vector<1x32xf32>
    %25 = arith.divf %23, %24 : vector<1x32xf32>
    %26 = vector.extract_strided_slice %13 {offsets = [0, 64], sizes = [1, 32], strides = [1, 1]} : vector<1x128xf32> to vector<1x32xf32>
    %27 = math.tanh %26 : vector<1x32xf32>
    %28 = vector.extract_strided_slice %13 {offsets = [0, 96], sizes = [1, 32], strides = [1, 1]} : vector<1x128xf32> to vector<1x32xf32>
    %29 = arith.negf %28 : vector<1x32xf32>
    %30 = math.exp %29 : vector<1x32xf32>
    %cst_14 = arith.constant 1.000000e+00 : f32
    %31 = vector.broadcast %cst_14 : f32 to vector<1x32xf32>
    %32 = arith.addf %31, %30 : vector<1x32xf32>
    %33 = arith.divf %31, %32 : vector<1x32xf32>
    %34 = arith.mulf %25, %10 : vector<1x32xf32>
    %35 = arith.mulf %19, %27 : vector<1x32xf32>
    %36 = arith.addf %34, %35 : vector<1x32xf32>
    %37 = math.tanh %36 : vector<1x32xf32>
    %38 = arith.mulf %33, %37 : vector<1x32xf32>
    %c0_15 = arith.constant 0 : index
    %c0_16 = arith.constant 0 : index
    %39 = vector.load %arg7[%c0_15, %c0_16] : memref<8x32xf32, #tpu.memory_space<vmem>>, vector<1x32xf32>
    tpu.vector_store %arg7[%c0_15, %c0_16], %38 {strides = array<i32>} : memref<8x32xf32, #tpu.memory_space<vmem>>, vector<1x32xf32>,
    %40 = vector.extract_strided_slice %8 {offsets = [1, 0], sizes = [1, 128], strides = [1, 1]} : vector<8x128xf32> to vector<1x128xf32>
    %cst_17 = arith.constant dense<0.000000e+00> : vector<1x128xf32>
    %41 = tpu.matmul %38, %4, %cst_17 {dimension_numbers = #tpu.dot_dimension_numbers<[1], [0], [0], [1], [0, 0, 1, 1], [], []>} : vector<1x32xf32>, vector<32x128xf32>, vector<1x128xf32> -> vector<1x128xf32>
    %42 = arith.addf %40, %41 : vector<1x128xf32>
    %43 = vector.extract_strided_slice %42 {offsets = [0, 0], sizes = [1, 32], strides = [1, 1]} : vector<1x128xf32> to vector<1x32xf32>
    %44 = arith.negf %43 : vector<1x32xf32>
    %45 = math.exp %44 : vector<1x32xf32>
    %cst_18 = arith.constant 1.000000e+00 : f32
    %46 = vector.broadcast %cst_18 : f32 to vector<1x32xf32>
    %47 = arith.addf %46, %45 : vector<1x32xf32>
    %48 = arith.divf %46, %47 : vector<1x32xf32>
    %49 = vector.extract_strided_slice %42 {offsets = [0, 32], sizes = [1, 32], strides = [1, 1]} : vector<1x128xf32> to vector<1x32xf32>
    %50 = arith.negf %49 : vector<1x32xf32>
    %51 = math.exp %50 : vector<1x32xf32>
    %cst_19 = arith.constant 1.000000e+00 : f32
    %52 = vector.broadcast %cst_19 : f32 to vector<1x32xf32>
    %53 = arith.addf %52, %51 : vector<1x32xf32>
    %54 = arith.divf %52, %53 : vector<1x32xf32>
    %55 = vector.extract_strided_slice %42 {offsets = [0, 64], sizes = [1, 32], strides = [1, 1]} : vector<1x128xf32> to vector<1x32xf32>
    %56 = math.tanh %55 : vector<1x32xf32>
    %57 = vector.extract_strided_slice %42 {offsets = [0, 96], sizes = [1, 32], strides = [1, 1]} : vector<1x128xf32> to vector<1x32xf32>
    %58 = arith.negf %57 : vector<1x32xf32>
    %59 = math.exp %58 : vector<1x32xf32>
    %cst_20 = arith.constant 1.000000e+00 : f32
    %60 = vector.broadcast %cst_20 : f32 to vector<1x32xf32>
    %61 = arith.addf %60, %59 : vector<1x32xf32>
    %62 = arith.divf %60, %61 : vector<1x32xf32>
    %63 = arith.mulf %54, %36 : vector<1x32xf32>
    %64 = arith.mulf %48, %56 : vector<1x32xf32>
    %65 = arith.addf %63, %64 : vector<1x32xf32>
    %66 = math.tanh %65 : vector<1x32xf32>
    %67 = arith.mulf %62, %66 : vector<1x32xf32>
    %c1 = arith.constant 1 : index
    %c0_21 = arith.constant 0 : index
    %68 = vector.load %arg7[%c1, %c0_21] : memref<8x32xf32, #tpu.memory_space<vmem>>, vector<1x32xf32>
    tpu.vector_store %arg7[%c1, %c0_21], %67 {strides = array<i32>} : memref<8x32xf32, #tpu.memory_space<vmem>>, vector<1x32xf32>,
    %69 = vector.extract_strided_slice %8 {offsets = [2, 0], sizes = [1, 128], strides = [1, 1]} : vector<8x128xf32> to vector<1x128xf32>
    %cst_22 = arith.constant dense<0.000000e+00> : vector<1x128xf32>
    %70 = tpu.matmul %67, %4, %cst_22 {dimension_numbers = #tpu.dot_dimension_numbers<[1], [0], [0], [1], [0, 0, 1, 1], [], []>} : vector<1x32xf32>, vector<32x128xf32>, vector<1x128xf32> -> vector<1x128xf32>
    %71 = arith.addf %69, %70 : vector<1x128xf32>
    %72 = vector.extract_strided_slice %71 {offsets = [0, 0], sizes = [1, 32], strides = [1, 1]} : vector<1x128xf32> to vector<1x32xf32>
    %73 = arith.negf %72 : vector<1x32xf32>
    %74 = math.exp %73 : vector<1x32xf32>
    %cst_23 = arith.constant 1.000000e+00 : f32
    %75 = vector.broadcast %cst_23 : f32 to vector<1x32xf32>
    %76 = arith.addf %75, %74 : vector<1x32xf32>
    %77 = arith.divf %75, %76 : vector<1x32xf32>
    %78 = vector.extract_strided_slice %71 {offsets = [0, 32], sizes = [1, 32], strides = [1, 1]} : vector<1x128xf32> to vector<1x32xf32>
    %79 = arith.negf %78 : vector<1x32xf32>
    %80 = math.exp %79 : vector<1x32xf32>
    %cst_24 = arith.constant 1.000000e+00 : f32
    %81 = vector.broadcast %cst_24 : f32 to vector<1x32xf32>
    %82 = arith.addf %81, %80 : vector<1x32xf32>
    %83 = arith.divf %81, %82 : vector<1x32xf32>
    %84 = vector.extract_strided_slice %71 {offsets = [0, 64], sizes = [1, 32], strides = [1, 1]} : vector<1x128xf32> to vector<1x32xf32>
    %85 = math.tanh %84 : vector<1x32xf32>
    %86 = vector.extract_strided_slice %71 {offsets = [0, 96], sizes = [1, 32], strides = [1, 1]} : vector<1x128xf32> to vector<1x32xf32>
    %87 = arith.negf %86 : vector<1x32xf32>
    %88 = math.exp %87 : vector<1x32xf32>
    %cst_25 = arith.constant 1.000000e+00 : f32
    %89 = vector.broadcast %cst_25 : f32 to vector<1x32xf32>
    %90 = arith.addf %89, %88 : vector<1x32xf32>
    %91 = arith.divf %89, %90 : vector<1x32xf32>
    %92 = arith.mulf %83, %65 : vector<1x32xf32>
    %93 = arith.mulf %77, %85 : vector<1x32xf32>
    %94 = arith.addf %92, %93 : vector<1x32xf32>
    %95 = math.tanh %94 : vector<1x32xf32>
    %96 = arith.mulf %91, %95 : vector<1x32xf32>
    %c2 = arith.constant 2 : index
    %c0_26 = arith.constant 0 : index
    %97 = vector.load %arg7[%c2, %c0_26] : memref<8x32xf32, #tpu.memory_space<vmem>>, vector<1x32xf32>
    tpu.vector_store %arg7[%c2, %c0_26], %96 {strides = array<i32>} : memref<8x32xf32, #tpu.memory_space<vmem>>, vector<1x32xf32>,
    %98 = vector.extract_strided_slice %8 {offsets = [3, 0], sizes = [1, 128], strides = [1, 1]} : vector<8x128xf32> to vector<1x128xf32>
    %cst_27 = arith.constant dense<0.000000e+00> : vector<1x128xf32>
    %99 = tpu.matmul %96, %4, %cst_27 {dimension_numbers = #tpu.dot_dimension_numbers<[1], [0], [0], [1], [0, 0, 1, 1], [], []>} : vector<1x32xf32>, vector<32x128xf32>, vector<1x128xf32> -> vector<1x128xf32>
    %100 = arith.addf %98, %99 : vector<1x128xf32>
    %101 = vector.extract_strided_slice %100 {offsets = [0, 0], sizes = [1, 32], strides = [1, 1]} : vector<1x128xf32> to vector<1x32xf32>
    %102 = arith.negf %101 : vector<1x32xf32>
    %103 = math.exp %102 : vector<1x32xf32>
    %cst_28 = arith.constant 1.000000e+00 : f32
    %104 = vector.broadcast %cst_28 : f32 to vector<1x32xf32>
    %105 = arith.addf %104, %103 : vector<1x32xf32>
    %106 = arith.divf %104, %105 : vector<1x32xf32>
    %107 = vector.extract_strided_slice %100 {offsets = [0, 32], sizes = [1, 32], strides = [1, 1]} : vector<1x128xf32> to vector<1x32xf32>
    %108 = arith.negf %107 : vector<1x32xf32>
    %109 = math.exp %108 : vector<1x32xf32>
    %cst_29 = arith.constant 1.000000e+00 : f32
    %110 = vector.broadcast %cst_29 : f32 to vector<1x32xf32>
    %111 = arith.addf %110, %109 : vector<1x32xf32>
    %112 = arith.divf %110, %111 : vector<1x32xf32>
    %113 = vector.extract_strided_slice %100 {offsets = [0, 64], sizes = [1, 32], strides = [1, 1]} : vector<1x128xf32> to vector<1x32xf32>
    %114 = math.tanh %113 : vector<1x32xf32>
    %115 = vector.extract_strided_slice %100 {offsets = [0, 96], sizes = [1, 32], strides = [1, 1]} : vector<1x128xf32> to vector<1x32xf32>
    %116 = arith.negf %115 : vector<1x32xf32>
    %117 = math.exp %116 : vector<1x32xf32>
    %cst_30 = arith.constant 1.000000e+00 : f32
    %118 = vector.broadcast %cst_30 : f32 to vector<1x32xf32>
    %119 = arith.addf %118, %117 : vector<1x32xf32>
    %120 = arith.divf %118, %119 : vector<1x32xf32>
    %121 = arith.mulf %112, %94 : vector<1x32xf32>
    %122 = arith.mulf %106, %114 : vector<1x32xf32>
    %123 = arith.addf %121, %122 : vector<1x32xf32>
    %124 = math.tanh %123 : vector<1x32xf32>
    %125 = arith.mulf %120, %124 : vector<1x32xf32>
    %c3 = arith.constant 3 : index
    %c0_31 = arith.constant 0 : index
    %126 = vector.load %arg7[%c3, %c0_31] : memref<8x32xf32, #tpu.memory_space<vmem>>, vector<1x32xf32>
    tpu.vector_store %arg7[%c3, %c0_31], %125 {strides = array<i32>} : memref<8x32xf32, #tpu.memory_space<vmem>>, vector<1x32xf32>,
    %127 = vector.extract_strided_slice %8 {offsets = [4, 0], sizes = [1, 128], strides = [1, 1]} : vector<8x128xf32> to vector<1x128xf32>
    %cst_32 = arith.constant dense<0.000000e+00> : vector<1x128xf32>
    %128 = tpu.matmul %125, %4, %cst_32 {dimension_numbers = #tpu.dot_dimension_numbers<[1], [0], [0], [1], [0, 0, 1, 1], [], []>} : vector<1x32xf32>, vector<32x128xf32>, vector<1x128xf32> -> vector<1x128xf32>
    %129 = arith.addf %127, %128 : vector<1x128xf32>
    %130 = vector.extract_strided_slice %129 {offsets = [0, 0], sizes = [1, 32], strides = [1, 1]} : vector<1x128xf32> to vector<1x32xf32>
    %131 = arith.negf %130 : vector<1x32xf32>
    %132 = math.exp %131 : vector<1x32xf32>
    %cst_33 = arith.constant 1.000000e+00 : f32
    %133 = vector.broadcast %cst_33 : f32 to vector<1x32xf32>
    %134 = arith.addf %133, %132 : vector<1x32xf32>
    %135 = arith.divf %133, %134 : vector<1x32xf32>
    %136 = vector.extract_strided_slice %129 {offsets = [0, 32], sizes = [1, 32], strides = [1, 1]} : vector<1x128xf32> to vector<1x32xf32>
    %137 = arith.negf %136 : vector<1x32xf32>
    %138 = math.exp %137 : vector<1x32xf32>
    %cst_34 = arith.constant 1.000000e+00 : f32
    %139 = vector.broadcast %cst_34 : f32 to vector<1x32xf32>
    %140 = arith.addf %139, %138 : vector<1x32xf32>
    %141 = arith.divf %139, %140 : vector<1x32xf32>
    %142 = vector.extract_strided_slice %129 {offsets = [0, 64], sizes = [1, 32], strides = [1, 1]} : vector<1x128xf32> to vector<1x32xf32>
    %143 = math.tanh %142 : vector<1x32xf32>
    %144 = vector.extract_strided_slice %129 {offsets = [0, 96], sizes = [1, 32], strides = [1, 1]} : vector<1x128xf32> to vector<1x32xf32>
    %145 = arith.negf %144 : vector<1x32xf32>
    %146 = math.exp %145 : vector<1x32xf32>
    %cst_35 = arith.constant 1.000000e+00 : f32
    %147 = vector.broadcast %cst_35 : f32 to vector<1x32xf32>
    %148 = arith.addf %147, %146 : vector<1x32xf32>
    %149 = arith.divf %147, %148 : vector<1x32xf32>
    %150 = arith.mulf %141, %123 : vector<1x32xf32>
    %151 = arith.mulf %135, %143 : vector<1x32xf32>
    %152 = arith.addf %150, %151 : vector<1x32xf32>
    %153 = math.tanh %152 : vector<1x32xf32>
    %154 = arith.mulf %149, %153 : vector<1x32xf32>
    %c4 = arith.constant 4 : index
    %c0_36 = arith.constant 0 : index
    %155 = vector.load %arg7[%c4, %c0_36] : memref<8x32xf32, #tpu.memory_space<vmem>>, vector<1x32xf32>
    tpu.vector_store %arg7[%c4, %c0_36], %154 {strides = array<i32>} : memref<8x32xf32, #tpu.memory_space<vmem>>, vector<1x32xf32>,
    %156 = vector.extract_strided_slice %8 {offsets = [5, 0], sizes = [1, 128], strides = [1, 1]} : vector<8x128xf32> to vector<1x128xf32>
    %cst_37 = arith.constant dense<0.000000e+00> : vector<1x128xf32>
    %157 = tpu.matmul %154, %4, %cst_37 {dimension_numbers = #tpu.dot_dimension_numbers<[1], [0], [0], [1], [0, 0, 1, 1], [], []>} : vector<1x32xf32>, vector<32x128xf32>, vector<1x128xf32> -> vector<1x128xf32>
    %158 = arith.addf %156, %157 : vector<1x128xf32>
    %159 = vector.extract_strided_slice %158 {offsets = [0, 0], sizes = [1, 32], strides = [1, 1]} : vector<1x128xf32> to vector<1x32xf32>
    %160 = arith.negf %159 : vector<1x32xf32>
    %161 = math.exp %160 : vector<1x32xf32>
    %cst_38 = arith.constant 1.000000e+00 : f32
    %162 = vector.broadcast %cst_38 : f32 to vector<1x32xf32>
    %163 = arith.addf %162, %161 : vector<1x32xf32>
    %164 = arith.divf %162, %163 : vector<1x32xf32>
    %165 = vector.extract_strided_slice %158 {offsets = [0, 32], sizes = [1, 32], strides = [1, 1]} : vector<1x128xf32> to vector<1x32xf32>
    %166 = arith.negf %165 : vector<1x32xf32>
    %167 = math.exp %166 : vector<1x32xf32>
    %cst_39 = arith.constant 1.000000e+00 : f32
    %168 = vector.broadcast %cst_39 : f32 to vector<1x32xf32>
    %169 = arith.addf %168, %167 : vector<1x32xf32>
    %170 = arith.divf %168, %169 : vector<1x32xf32>
    %171 = vector.extract_strided_slice %158 {offsets = [0, 64], sizes = [1, 32], strides = [1, 1]} : vector<1x128xf32> to vector<1x32xf32>
    %172 = math.tanh %171 : vector<1x32xf32>
    %173 = vector.extract_strided_slice %158 {offsets = [0, 96], sizes = [1, 32], strides = [1, 1]} : vector<1x128xf32> to vector<1x32xf32>
    %174 = arith.negf %173 : vector<1x32xf32>
    %175 = math.exp %174 : vector<1x32xf32>
    %cst_40 = arith.constant 1.000000e+00 : f32
    %176 = vector.broadcast %cst_40 : f32 to vector<1x32xf32>
    %177 = arith.addf %176, %175 : vector<1x32xf32>
    %178 = arith.divf %176, %177 : vector<1x32xf32>
    %179 = arith.mulf %170, %152 : vector<1x32xf32>
    %180 = arith.mulf %164, %172 : vector<1x32xf32>
    %181 = arith.addf %179, %180 : vector<1x32xf32>
    %182 = math.tanh %181 : vector<1x32xf32>
    %183 = arith.mulf %178, %182 : vector<1x32xf32>
    %c5 = arith.constant 5 : index
    %c0_41 = arith.constant 0 : index
    %184 = vector.load %arg7[%c5, %c0_41] : memref<8x32xf32, #tpu.memory_space<vmem>>, vector<1x32xf32>
    tpu.vector_store %arg7[%c5, %c0_41], %183 {strides = array<i32>} : memref<8x32xf32, #tpu.memory_space<vmem>>, vector<1x32xf32>,
    %185 = vector.extract_strided_slice %8 {offsets = [6, 0], sizes = [1, 128], strides = [1, 1]} : vector<8x128xf32> to vector<1x128xf32>
    %cst_42 = arith.constant dense<0.000000e+00> : vector<1x128xf32>
    %186 = tpu.matmul %183, %4, %cst_42 {dimension_numbers = #tpu.dot_dimension_numbers<[1], [0], [0], [1], [0, 0, 1, 1], [], []>} : vector<1x32xf32>, vector<32x128xf32>, vector<1x128xf32> -> vector<1x128xf32>
    %187 = arith.addf %185, %186 : vector<1x128xf32>
    %188 = vector.extract_strided_slice %187 {offsets = [0, 0], sizes = [1, 32], strides = [1, 1]} : vector<1x128xf32> to vector<1x32xf32>
    %189 = arith.negf %188 : vector<1x32xf32>
    %190 = math.exp %189 : vector<1x32xf32>
    %cst_43 = arith.constant 1.000000e+00 : f32
    %191 = vector.broadcast %cst_43 : f32 to vector<1x32xf32>
    %192 = arith.addf %191, %190 : vector<1x32xf32>
    %193 = arith.divf %191, %192 : vector<1x32xf32>
    %194 = vector.extract_strided_slice %187 {offsets = [0, 32], sizes = [1, 32], strides = [1, 1]} : vector<1x128xf32> to vector<1x32xf32>
    %195 = arith.negf %194 : vector<1x32xf32>
    %196 = math.exp %195 : vector<1x32xf32>
    %cst_44 = arith.constant 1.000000e+00 : f32
    %197 = vector.broadcast %cst_44 : f32 to vector<1x32xf32>
    %198 = arith.addf %197, %196 : vector<1x32xf32>
    %199 = arith.divf %197, %198 : vector<1x32xf32>
    %200 = vector.extract_strided_slice %187 {offsets = [0, 64], sizes = [1, 32], strides = [1, 1]} : vector<1x128xf32> to vector<1x32xf32>
    %201 = math.tanh %200 : vector<1x32xf32>
    %202 = vector.extract_strided_slice %187 {offsets = [0, 96], sizes = [1, 32], strides = [1, 1]} : vector<1x128xf32> to vector<1x32xf32>
    %203 = arith.negf %202 : vector<1x32xf32>
    %204 = math.exp %203 : vector<1x32xf32>
    %cst_45 = arith.constant 1.000000e+00 : f32
    %205 = vector.broadcast %cst_45 : f32 to vector<1x32xf32>
    %206 = arith.addf %205, %204 : vector<1x32xf32>
    %207 = arith.divf %205, %206 : vector<1x32xf32>
    %208 = arith.mulf %199, %181 : vector<1x32xf32>
    %209 = arith.mulf %193, %201 : vector<1x32xf32>
    %210 = arith.addf %208, %209 : vector<1x32xf32>
    %211 = math.tanh %210 : vector<1x32xf32>
    %212 = arith.mulf %207, %211 : vector<1x32xf32>
    %c6 = arith.constant 6 : index
    %c0_46 = arith.constant 0 : index
    %213 = vector.load %arg7[%c6, %c0_46] : memref<8x32xf32, #tpu.memory_space<vmem>>, vector<1x32xf32>
    tpu.vector_store %arg7[%c6, %c0_46], %212 {strides = array<i32>} : memref<8x32xf32, #tpu.memory_space<vmem>>, vector<1x32xf32>,
    %214 = vector.extract_strided_slice %8 {offsets = [7, 0], sizes = [1, 128], strides = [1, 1]} : vector<8x128xf32> to vector<1x128xf32>
    %cst_47 = arith.constant dense<0.000000e+00> : vector<1x128xf32>
    %215 = tpu.matmul %212, %4, %cst_47 {dimension_numbers = #tpu.dot_dimension_numbers<[1], [0], [0], [1], [0, 0, 1, 1], [], []>} : vector<1x32xf32>, vector<32x128xf32>, vector<1x128xf32> -> vector<1x128xf32>
    %216 = arith.addf %214, %215 : vector<1x128xf32>
    %217 = vector.extract_strided_slice %216 {offsets = [0, 0], sizes = [1, 32], strides = [1, 1]} : vector<1x128xf32> to vector<1x32xf32>
    %218 = arith.negf %217 : vector<1x32xf32>
    %219 = math.exp %218 : vector<1x32xf32>
    %cst_48 = arith.constant 1.000000e+00 : f32
    %220 = vector.broadcast %cst_48 : f32 to vector<1x32xf32>
    %221 = arith.addf %220, %219 : vector<1x32xf32>
    %222 = arith.divf %220, %221 : vector<1x32xf32>
    %223 = vector.extract_strided_slice %216 {offsets = [0, 32], sizes = [1, 32], strides = [1, 1]} : vector<1x128xf32> to vector<1x32xf32>
    %224 = arith.negf %223 : vector<1x32xf32>
    %225 = math.exp %224 : vector<1x32xf32>
    %cst_49 = arith.constant 1.000000e+00 : f32
    %226 = vector.broadcast %cst_49 : f32 to vector<1x32xf32>
    %227 = arith.addf %226, %225 : vector<1x32xf32>
    %228 = arith.divf %226, %227 : vector<1x32xf32>
    %229 = vector.extract_strided_slice %216 {offsets = [0, 64], sizes = [1, 32], strides = [1, 1]} : vector<1x128xf32> to vector<1x32xf32>
    %230 = math.tanh %229 : vector<1x32xf32>
    %231 = vector.extract_strided_slice %216 {offsets = [0, 96], sizes = [1, 32], strides = [1, 1]} : vector<1x128xf32> to vector<1x32xf32>
    %232 = arith.negf %231 : vector<1x32xf32>
    %233 = math.exp %232 : vector<1x32xf32>
    %cst_50 = arith.constant 1.000000e+00 : f32
    %234 = vector.broadcast %cst_50 : f32 to vector<1x32xf32>
    %235 = arith.addf %234, %233 : vector<1x32xf32>
    %236 = arith.divf %234, %235 : vector<1x32xf32>
    %237 = arith.mulf %228, %210 : vector<1x32xf32>
    %238 = arith.mulf %222, %230 : vector<1x32xf32>
    %239 = arith.addf %237, %238 : vector<1x32xf32>
    %240 = math.tanh %239 : vector<1x32xf32>
    %241 = arith.mulf %236, %240 : vector<1x32xf32>
    %c7 = arith.constant 7 : index
    %c0_51 = arith.constant 0 : index
    %242 = vector.load %arg7[%c7, %c0_51] : memref<8x32xf32, #tpu.memory_space<vmem>>, vector<1x32xf32>
    tpu.vector_store %arg7[%c7, %c0_51], %241 {strides = array<i32>} : memref<8x32xf32, #tpu.memory_space<vmem>>, vector<1x32xf32>,
    %c0_52 = arith.constant 0 : index
    %c0_53 = arith.constant 0 : index
    %243 = vector.load %arg7[%c0_52, %c0_53] : memref<8x32xf32, #tpu.memory_space<vmem>>, vector<8x32xf32>
    %c1_54 = arith.constant 1 : index
    %c0_55 = arith.constant 0 : index
    %c0_56 = arith.constant 0 : index
    %244 = vector.load %arg1[%c1_54, %c0_55, %c0_56] : memref<2x32x128xf32, #tpu.memory_space<vmem>>, vector<1x32x128xf32>
    %245 = vector.shape_cast %244 : vector<1x32x128xf32> to vector<32x128xf32>
    %c1_57 = arith.constant 1 : index
    %c0_58 = arith.constant 0 : index
    %c0_59 = arith.constant 0 : index
    %246 = vector.load %arg2[%c1_57, %c0_58, %c0_59] : memref<2x32x128xf32, #tpu.memory_space<vmem>>, vector<1x32x128xf32>
    %247 = vector.shape_cast %246 : vector<1x32x128xf32> to vector<32x128xf32>
    %c1_60 = arith.constant 1 : index
    %c0_61 = arith.constant 0 : index
    %248 = vector.load %arg3[%c1_60, %c0_61] : memref<2x128xf32, #tpu.memory_space<vmem>>, vector<1x128xf32>
    %cst_62 = arith.constant dense<0.000000e+00> : vector<8x128xf32>
    %249 = tpu.matmul %243, %245, %cst_62 {dimension_numbers = #tpu.dot_dimension_numbers<[1], [0], [0], [1], [0, 0, 1, 1], [], []>} : vector<8x32xf32>, vector<32x128xf32>, vector<8x128xf32> -> vector<8x128xf32>
    %250 = vector.broadcast %248 : vector<1x128xf32> to vector<8x128xf32>
    %251 = arith.addf %249, %250 : vector<8x128xf32>
    %cst_63 = arith.constant 0.000000e+00 : f32
    %252 = vector.broadcast %cst_63 : f32 to vector<1x32xf32>
    %cst_64 = arith.constant 0.000000e+00 : f32
    %253 = vector.broadcast %cst_64 : f32 to vector<1x32xf32>
    %254 = vector.extract_strided_slice %251 {offsets = [0, 0], sizes = [1, 128], strides = [1, 1]} : vector<8x128xf32> to vector<1x128xf32>
    %cst_65 = arith.constant dense<0.000000e+00> : vector<1x128xf32>
    %255 = tpu.matmul %252, %247, %cst_65 {dimension_numbers = #tpu.dot_dimension_numbers<[1], [0], [0], [1], [0, 0, 1, 1], [], []>} : vector<1x32xf32>, vector<32x128xf32>, vector<1x128xf32> -> vector<1x128xf32>
    %256 = arith.addf %254, %255 : vector<1x128xf32>
    %257 = vector.extract_strided_slice %256 {offsets = [0, 0], sizes = [1, 32], strides = [1, 1]} : vector<1x128xf32> to vector<1x32xf32>
    %258 = arith.negf %257 : vector<1x32xf32>
    %259 = math.exp %258 : vector<1x32xf32>
    %cst_66 = arith.constant 1.000000e+00 : f32
    %260 = vector.broadcast %cst_66 : f32 to vector<1x32xf32>
    %261 = arith.addf %260, %259 : vector<1x32xf32>
    %262 = arith.divf %260, %261 : vector<1x32xf32>
    %263 = vector.extract_strided_slice %256 {offsets = [0, 32], sizes = [1, 32], strides = [1, 1]} : vector<1x128xf32> to vector<1x32xf32>
    %264 = arith.negf %263 : vector<1x32xf32>
    %265 = math.exp %264 : vector<1x32xf32>
    %cst_67 = arith.constant 1.000000e+00 : f32
    %266 = vector.broadcast %cst_67 : f32 to vector<1x32xf32>
    %267 = arith.addf %266, %265 : vector<1x32xf32>
    %268 = arith.divf %266, %267 : vector<1x32xf32>
    %269 = vector.extract_strided_slice %256 {offsets = [0, 64], sizes = [1, 32], strides = [1, 1]} : vector<1x128xf32> to vector<1x32xf32>
    %270 = math.tanh %269 : vector<1x32xf32>
    %271 = vector.extract_strided_slice %256 {offsets = [0, 96], sizes = [1, 32], strides = [1, 1]} : vector<1x128xf32> to vector<1x32xf32>
    %272 = arith.negf %271 : vector<1x32xf32>
    %273 = math.exp %272 : vector<1x32xf32>
    %cst_68 = arith.constant 1.000000e+00 : f32
    %274 = vector.broadcast %cst_68 : f32 to vector<1x32xf32>
    %275 = arith.addf %274, %273 : vector<1x32xf32>
    %276 = arith.divf %274, %275 : vector<1x32xf32>
    %277 = arith.mulf %268, %253 : vector<1x32xf32>
    %278 = arith.mulf %262, %270 : vector<1x32xf32>
    %279 = arith.addf %277, %278 : vector<1x32xf32>
    %280 = math.tanh %279 : vector<1x32xf32>
    %281 = arith.mulf %276, %280 : vector<1x32xf32>
    %c0_69 = arith.constant 0 : index
    %c0_70 = arith.constant 0 : index
    %282 = vector.load %arg7[%c0_69, %c0_70] : memref<8x32xf32, #tpu.memory_space<vmem>>, vector<1x32xf32>
    tpu.vector_store %arg7[%c0_69, %c0_70], %281 {strides = array<i32>} : memref<8x32xf32, #tpu.memory_space<vmem>>, vector<1x32xf32>,
    %283 = vector.extract_strided_slice %251 {offsets = [1, 0], sizes = [1, 128], strides = [1, 1]} : vector<8x128xf32> to vector<1x128xf32>
    %cst_71 = arith.constant dense<0.000000e+00> : vector<1x128xf32>
    %284 = tpu.matmul %281, %247, %cst_71 {dimension_numbers = #tpu.dot_dimension_numbers<[1], [0], [0], [1], [0, 0, 1, 1], [], []>} : vector<1x32xf32>, vector<32x128xf32>, vector<1x128xf32> -> vector<1x128xf32>
    %285 = arith.addf %283, %284 : vector<1x128xf32>
    %286 = vector.extract_strided_slice %285 {offsets = [0, 0], sizes = [1, 32], strides = [1, 1]} : vector<1x128xf32> to vector<1x32xf32>
    %287 = arith.negf %286 : vector<1x32xf32>
    %288 = math.exp %287 : vector<1x32xf32>
    %cst_72 = arith.constant 1.000000e+00 : f32
    %289 = vector.broadcast %cst_72 : f32 to vector<1x32xf32>
    %290 = arith.addf %289, %288 : vector<1x32xf32>
    %291 = arith.divf %289, %290 : vector<1x32xf32>
    %292 = vector.extract_strided_slice %285 {offsets = [0, 32], sizes = [1, 32], strides = [1, 1]} : vector<1x128xf32> to vector<1x32xf32>
    %293 = arith.negf %292 : vector<1x32xf32>
    %294 = math.exp %293 : vector<1x32xf32>
    %cst_73 = arith.constant 1.000000e+00 : f32
    %295 = vector.broadcast %cst_73 : f32 to vector<1x32xf32>
    %296 = arith.addf %295, %294 : vector<1x32xf32>
    %297 = arith.divf %295, %296 : vector<1x32xf32>
    %298 = vector.extract_strided_slice %285 {offsets = [0, 64], sizes = [1, 32], strides = [1, 1]} : vector<1x128xf32> to vector<1x32xf32>
    %299 = math.tanh %298 : vector<1x32xf32>
    %300 = vector.extract_strided_slice %285 {offsets = [0, 96], sizes = [1, 32], strides = [1, 1]} : vector<1x128xf32> to vector<1x32xf32>
    %301 = arith.negf %300 : vector<1x32xf32>
    %302 = math.exp %301 : vector<1x32xf32>
    %cst_74 = arith.constant 1.000000e+00 : f32
    %303 = vector.broadcast %cst_74 : f32 to vector<1x32xf32>
    %304 = arith.addf %303, %302 : vector<1x32xf32>
    %305 = arith.divf %303, %304 : vector<1x32xf32>
    %306 = arith.mulf %297, %279 : vector<1x32xf32>
    %307 = arith.mulf %291, %299 : vector<1x32xf32>
    %308 = arith.addf %306, %307 : vector<1x32xf32>
    %309 = math.tanh %308 : vector<1x32xf32>
    %310 = arith.mulf %305, %309 : vector<1x32xf32>
    %c1_75 = arith.constant 1 : index
    %c0_76 = arith.constant 0 : index
    %311 = vector.load %arg7[%c1_75, %c0_76] : memref<8x32xf32, #tpu.memory_space<vmem>>, vector<1x32xf32>
    tpu.vector_store %arg7[%c1_75, %c0_76], %310 {strides = array<i32>} : memref<8x32xf32, #tpu.memory_space<vmem>>, vector<1x32xf32>,
    %312 = vector.extract_strided_slice %251 {offsets = [2, 0], sizes = [1, 128], strides = [1, 1]} : vector<8x128xf32> to vector<1x128xf32>
    %cst_77 = arith.constant dense<0.000000e+00> : vector<1x128xf32>
    %313 = tpu.matmul %310, %247, %cst_77 {dimension_numbers = #tpu.dot_dimension_numbers<[1], [0], [0], [1], [0, 0, 1, 1], [], []>} : vector<1x32xf32>, vector<32x128xf32>, vector<1x128xf32> -> vector<1x128xf32>
    %314 = arith.addf %312, %313 : vector<1x128xf32>
    %315 = vector.extract_strided_slice %314 {offsets = [0, 0], sizes = [1, 32], strides = [1, 1]} : vector<1x128xf32> to vector<1x32xf32>
    %316 = arith.negf %315 : vector<1x32xf32>
    %317 = math.exp %316 : vector<1x32xf32>
    %cst_78 = arith.constant 1.000000e+00 : f32
    %318 = vector.broadcast %cst_78 : f32 to vector<1x32xf32>
    %319 = arith.addf %318, %317 : vector<1x32xf32>
    %320 = arith.divf %318, %319 : vector<1x32xf32>
    %321 = vector.extract_strided_slice %314 {offsets = [0, 32], sizes = [1, 32], strides = [1, 1]} : vector<1x128xf32> to vector<1x32xf32>
    %322 = arith.negf %321 : vector<1x32xf32>
    %323 = math.exp %322 : vector<1x32xf32>
    %cst_79 = arith.constant 1.000000e+00 : f32
    %324 = vector.broadcast %cst_79 : f32 to vector<1x32xf32>
    %325 = arith.addf %324, %323 : vector<1x32xf32>
    %326 = arith.divf %324, %325 : vector<1x32xf32>
    %327 = vector.extract_strided_slice %314 {offsets = [0, 64], sizes = [1, 32], strides = [1, 1]} : vector<1x128xf32> to vector<1x32xf32>
    %328 = math.tanh %327 : vector<1x32xf32>
    %329 = vector.extract_strided_slice %314 {offsets = [0, 96], sizes = [1, 32], strides = [1, 1]} : vector<1x128xf32> to vector<1x32xf32>
    %330 = arith.negf %329 : vector<1x32xf32>
    %331 = math.exp %330 : vector<1x32xf32>
    %cst_80 = arith.constant 1.000000e+00 : f32
    %332 = vector.broadcast %cst_80 : f32 to vector<1x32xf32>
    %333 = arith.addf %332, %331 : vector<1x32xf32>
    %334 = arith.divf %332, %333 : vector<1x32xf32>
    %335 = arith.mulf %326, %308 : vector<1x32xf32>
    %336 = arith.mulf %320, %328 : vector<1x32xf32>
    %337 = arith.addf %335, %336 : vector<1x32xf32>
    %338 = math.tanh %337 : vector<1x32xf32>
    %339 = arith.mulf %334, %338 : vector<1x32xf32>
    %c2_81 = arith.constant 2 : index
    %c0_82 = arith.constant 0 : index
    %340 = vector.load %arg7[%c2_81, %c0_82] : memref<8x32xf32, #tpu.memory_space<vmem>>, vector<1x32xf32>
    tpu.vector_store %arg7[%c2_81, %c0_82], %339 {strides = array<i32>} : memref<8x32xf32, #tpu.memory_space<vmem>>, vector<1x32xf32>,
    %341 = vector.extract_strided_slice %251 {offsets = [3, 0], sizes = [1, 128], strides = [1, 1]} : vector<8x128xf32> to vector<1x128xf32>
    %cst_83 = arith.constant dense<0.000000e+00> : vector<1x128xf32>
    %342 = tpu.matmul %339, %247, %cst_83 {dimension_numbers = #tpu.dot_dimension_numbers<[1], [0], [0], [1], [0, 0, 1, 1], [], []>} : vector<1x32xf32>, vector<32x128xf32>, vector<1x128xf32> -> vector<1x128xf32>
    %343 = arith.addf %341, %342 : vector<1x128xf32>
    %344 = vector.extract_strided_slice %343 {offsets = [0, 0], sizes = [1, 32], strides = [1, 1]} : vector<1x128xf32> to vector<1x32xf32>
    %345 = arith.negf %344 : vector<1x32xf32>
    %346 = math.exp %345 : vector<1x32xf32>
    %cst_84 = arith.constant 1.000000e+00 : f32
    %347 = vector.broadcast %cst_84 : f32 to vector<1x32xf32>
    %348 = arith.addf %347, %346 : vector<1x32xf32>
    %349 = arith.divf %347, %348 : vector<1x32xf32>
    %350 = vector.extract_strided_slice %343 {offsets = [0, 32], sizes = [1, 32], strides = [1, 1]} : vector<1x128xf32> to vector<1x32xf32>
    %351 = arith.negf %350 : vector<1x32xf32>
    %352 = math.exp %351 : vector<1x32xf32>
    %cst_85 = arith.constant 1.000000e+00 : f32
    %353 = vector.broadcast %cst_85 : f32 to vector<1x32xf32>
    %354 = arith.addf %353, %352 : vector<1x32xf32>
    %355 = arith.divf %353, %354 : vector<1x32xf32>
    %356 = vector.extract_strided_slice %343 {offsets = [0, 64], sizes = [1, 32], strides = [1, 1]} : vector<1x128xf32> to vector<1x32xf32>
    %357 = math.tanh %356 : vector<1x32xf32>
    %358 = vector.extract_strided_slice %343 {offsets = [0, 96], sizes = [1, 32], strides = [1, 1]} : vector<1x128xf32> to vector<1x32xf32>
    %359 = arith.negf %358 : vector<1x32xf32>
    %360 = math.exp %359 : vector<1x32xf32>
    %cst_86 = arith.constant 1.000000e+00 : f32
    %361 = vector.broadcast %cst_86 : f32 to vector<1x32xf32>
    %362 = arith.addf %361, %360 : vector<1x32xf32>
    %363 = arith.divf %361, %362 : vector<1x32xf32>
    %364 = arith.mulf %355, %337 : vector<1x32xf32>
    %365 = arith.mulf %349, %357 : vector<1x32xf32>
    %366 = arith.addf %364, %365 : vector<1x32xf32>
    %367 = math.tanh %366 : vector<1x32xf32>
    %368 = arith.mulf %363, %367 : vector<1x32xf32>
    %c3_87 = arith.constant 3 : index
    %c0_88 = arith.constant 0 : index
    %369 = vector.load %arg7[%c3_87, %c0_88] : memref<8x32xf32, #tpu.memory_space<vmem>>, vector<1x32xf32>
    tpu.vector_store %arg7[%c3_87, %c0_88], %368 {strides = array<i32>} : memref<8x32xf32, #tpu.memory_space<vmem>>, vector<1x32xf32>,
    %370 = vector.extract_strided_slice %251 {offsets = [4, 0], sizes = [1, 128], strides = [1, 1]} : vector<8x128xf32> to vector<1x128xf32>
    %cst_89 = arith.constant dense<0.000000e+00> : vector<1x128xf32>
    %371 = tpu.matmul %368, %247, %cst_89 {dimension_numbers = #tpu.dot_dimension_numbers<[1], [0], [0], [1], [0, 0, 1, 1], [], []>} : vector<1x32xf32>, vector<32x128xf32>, vector<1x128xf32> -> vector<1x128xf32>
    %372 = arith.addf %370, %371 : vector<1x128xf32>
    %373 = vector.extract_strided_slice %372 {offsets = [0, 0], sizes = [1, 32], strides = [1, 1]} : vector<1x128xf32> to vector<1x32xf32>
    %374 = arith.negf %373 : vector<1x32xf32>
    %375 = math.exp %374 : vector<1x32xf32>
    %cst_90 = arith.constant 1.000000e+00 : f32
    %376 = vector.broadcast %cst_90 : f32 to vector<1x32xf32>
    %377 = arith.addf %376, %375 : vector<1x32xf32>
    %378 = arith.divf %376, %377 : vector<1x32xf32>
    %379 = vector.extract_strided_slice %372 {offsets = [0, 32], sizes = [1, 32], strides = [1, 1]} : vector<1x128xf32> to vector<1x32xf32>
    %380 = arith.negf %379 : vector<1x32xf32>
    %381 = math.exp %380 : vector<1x32xf32>
    %cst_91 = arith.constant 1.000000e+00 : f32
    %382 = vector.broadcast %cst_91 : f32 to vector<1x32xf32>
    %383 = arith.addf %382, %381 : vector<1x32xf32>
    %384 = arith.divf %382, %383 : vector<1x32xf32>
    %385 = vector.extract_strided_slice %372 {offsets = [0, 64], sizes = [1, 32], strides = [1, 1]} : vector<1x128xf32> to vector<1x32xf32>
    %386 = math.tanh %385 : vector<1x32xf32>
    %387 = vector.extract_strided_slice %372 {offsets = [0, 96], sizes = [1, 32], strides = [1, 1]} : vector<1x128xf32> to vector<1x32xf32>
    %388 = arith.negf %387 : vector<1x32xf32>
    %389 = math.exp %388 : vector<1x32xf32>
    %cst_92 = arith.constant 1.000000e+00 : f32
    %390 = vector.broadcast %cst_92 : f32 to vector<1x32xf32>
    %391 = arith.addf %390, %389 : vector<1x32xf32>
    %392 = arith.divf %390, %391 : vector<1x32xf32>
    %393 = arith.mulf %384, %366 : vector<1x32xf32>
    %394 = arith.mulf %378, %386 : vector<1x32xf32>
    %395 = arith.addf %393, %394 : vector<1x32xf32>
    %396 = math.tanh %395 : vector<1x32xf32>
    %397 = arith.mulf %392, %396 : vector<1x32xf32>
    %c4_93 = arith.constant 4 : index
    %c0_94 = arith.constant 0 : index
    %398 = vector.load %arg7[%c4_93, %c0_94] : memref<8x32xf32, #tpu.memory_space<vmem>>, vector<1x32xf32>
    tpu.vector_store %arg7[%c4_93, %c0_94], %397 {strides = array<i32>} : memref<8x32xf32, #tpu.memory_space<vmem>>, vector<1x32xf32>,
    %399 = vector.extract_strided_slice %251 {offsets = [5, 0], sizes = [1, 128], strides = [1, 1]} : vector<8x128xf32> to vector<1x128xf32>
    %cst_95 = arith.constant dense<0.000000e+00> : vector<1x128xf32>
    %400 = tpu.matmul %397, %247, %cst_95 {dimension_numbers = #tpu.dot_dimension_numbers<[1], [0], [0], [1], [0, 0, 1, 1], [], []>} : vector<1x32xf32>, vector<32x128xf32>, vector<1x128xf32> -> vector<1x128xf32>
    %401 = arith.addf %399, %400 : vector<1x128xf32>
    %402 = vector.extract_strided_slice %401 {offsets = [0, 0], sizes = [1, 32], strides = [1, 1]} : vector<1x128xf32> to vector<1x32xf32>
    %403 = arith.negf %402 : vector<1x32xf32>
    %404 = math.exp %403 : vector<1x32xf32>
    %cst_96 = arith.constant 1.000000e+00 : f32
    %405 = vector.broadcast %cst_96 : f32 to vector<1x32xf32>
    %406 = arith.addf %405, %404 : vector<1x32xf32>
    %407 = arith.divf %405, %406 : vector<1x32xf32>
    %408 = vector.extract_strided_slice %401 {offsets = [0, 32], sizes = [1, 32], strides = [1, 1]} : vector<1x128xf32> to vector<1x32xf32>
    %409 = arith.negf %408 : vector<1x32xf32>
    %410 = math.exp %409 : vector<1x32xf32>
    %cst_97 = arith.constant 1.000000e+00 : f32
    %411 = vector.broadcast %cst_97 : f32 to vector<1x32xf32>
    %412 = arith.addf %411, %410 : vector<1x32xf32>
    %413 = arith.divf %411, %412 : vector<1x32xf32>
    %414 = vector.extract_strided_slice %401 {offsets = [0, 64], sizes = [1, 32], strides = [1, 1]} : vector<1x128xf32> to vector<1x32xf32>
    %415 = math.tanh %414 : vector<1x32xf32>
    %416 = vector.extract_strided_slice %401 {offsets = [0, 96], sizes = [1, 32], strides = [1, 1]} : vector<1x128xf32> to vector<1x32xf32>
    %417 = arith.negf %416 : vector<1x32xf32>
    %418 = math.exp %417 : vector<1x32xf32>
    %cst_98 = arith.constant 1.000000e+00 : f32
    %419 = vector.broadcast %cst_98 : f32 to vector<1x32xf32>
    %420 = arith.addf %419, %418 : vector<1x32xf32>
    %421 = arith.divf %419, %420 : vector<1x32xf32>
    %422 = arith.mulf %413, %395 : vector<1x32xf32>
    %423 = arith.mulf %407, %415 : vector<1x32xf32>
    %424 = arith.addf %422, %423 : vector<1x32xf32>
    %425 = math.tanh %424 : vector<1x32xf32>
    %426 = arith.mulf %421, %425 : vector<1x32xf32>
    %c5_99 = arith.constant 5 : index
    %c0_100 = arith.constant 0 : index
    %427 = vector.load %arg7[%c5_99, %c0_100] : memref<8x32xf32, #tpu.memory_space<vmem>>, vector<1x32xf32>
    tpu.vector_store %arg7[%c5_99, %c0_100], %426 {strides = array<i32>} : memref<8x32xf32, #tpu.memory_space<vmem>>, vector<1x32xf32>,
    %428 = vector.extract_strided_slice %251 {offsets = [6, 0], sizes = [1, 128], strides = [1, 1]} : vector<8x128xf32> to vector<1x128xf32>
    %cst_101 = arith.constant dense<0.000000e+00> : vector<1x128xf32>
    %429 = tpu.matmul %426, %247, %cst_101 {dimension_numbers = #tpu.dot_dimension_numbers<[1], [0], [0], [1], [0, 0, 1, 1], [], []>} : vector<1x32xf32>, vector<32x128xf32>, vector<1x128xf32> -> vector<1x128xf32>
    %430 = arith.addf %428, %429 : vector<1x128xf32>
    %431 = vector.extract_strided_slice %430 {offsets = [0, 0], sizes = [1, 32], strides = [1, 1]} : vector<1x128xf32> to vector<1x32xf32>
    %432 = arith.negf %431 : vector<1x32xf32>
    %433 = math.exp %432 : vector<1x32xf32>
    %cst_102 = arith.constant 1.000000e+00 : f32
    %434 = vector.broadcast %cst_102 : f32 to vector<1x32xf32>
    %435 = arith.addf %434, %433 : vector<1x32xf32>
    %436 = arith.divf %434, %435 : vector<1x32xf32>
    %437 = vector.extract_strided_slice %430 {offsets = [0, 32], sizes = [1, 32], strides = [1, 1]} : vector<1x128xf32> to vector<1x32xf32>
    %438 = arith.negf %437 : vector<1x32xf32>
    %439 = math.exp %438 : vector<1x32xf32>
    %cst_103 = arith.constant 1.000000e+00 : f32
    %440 = vector.broadcast %cst_103 : f32 to vector<1x32xf32>
    %441 = arith.addf %440, %439 : vector<1x32xf32>
    %442 = arith.divf %440, %441 : vector<1x32xf32>
    %443 = vector.extract_strided_slice %430 {offsets = [0, 64], sizes = [1, 32], strides = [1, 1]} : vector<1x128xf32> to vector<1x32xf32>
    %444 = math.tanh %443 : vector<1x32xf32>
    %445 = vector.extract_strided_slice %430 {offsets = [0, 96], sizes = [1, 32], strides = [1, 1]} : vector<1x128xf32> to vector<1x32xf32>
    %446 = arith.negf %445 : vector<1x32xf32>
    %447 = math.exp %446 : vector<1x32xf32>
    %cst_104 = arith.constant 1.000000e+00 : f32
    %448 = vector.broadcast %cst_104 : f32 to vector<1x32xf32>
    %449 = arith.addf %448, %447 : vector<1x32xf32>
    %450 = arith.divf %448, %449 : vector<1x32xf32>
    %451 = arith.mulf %442, %424 : vector<1x32xf32>
    %452 = arith.mulf %436, %444 : vector<1x32xf32>
    %453 = arith.addf %451, %452 : vector<1x32xf32>
    %454 = math.tanh %453 : vector<1x32xf32>
    %455 = arith.mulf %450, %454 : vector<1x32xf32>
    %c6_105 = arith.constant 6 : index
    %c0_106 = arith.constant 0 : index
    %456 = vector.load %arg7[%c6_105, %c0_106] : memref<8x32xf32, #tpu.memory_space<vmem>>, vector<1x32xf32>
    tpu.vector_store %arg7[%c6_105, %c0_106], %455 {strides = array<i32>} : memref<8x32xf32, #tpu.memory_space<vmem>>, vector<1x32xf32>,
    %457 = vector.extract_strided_slice %251 {offsets = [7, 0], sizes = [1, 128], strides = [1, 1]} : vector<8x128xf32> to vector<1x128xf32>
    %cst_107 = arith.constant dense<0.000000e+00> : vector<1x128xf32>
    %458 = tpu.matmul %455, %247, %cst_107 {dimension_numbers = #tpu.dot_dimension_numbers<[1], [0], [0], [1], [0, 0, 1, 1], [], []>} : vector<1x32xf32>, vector<32x128xf32>, vector<1x128xf32> -> vector<1x128xf32>
    %459 = arith.addf %457, %458 : vector<1x128xf32>
    %460 = vector.extract_strided_slice %459 {offsets = [0, 0], sizes = [1, 32], strides = [1, 1]} : vector<1x128xf32> to vector<1x32xf32>
    %461 = arith.negf %460 : vector<1x32xf32>
    %462 = math.exp %461 : vector<1x32xf32>
    %cst_108 = arith.constant 1.000000e+00 : f32
    %463 = vector.broadcast %cst_108 : f32 to vector<1x32xf32>
    %464 = arith.addf %463, %462 : vector<1x32xf32>
    %465 = arith.divf %463, %464 : vector<1x32xf32>
    %466 = vector.extract_strided_slice %459 {offsets = [0, 32], sizes = [1, 32], strides = [1, 1]} : vector<1x128xf32> to vector<1x32xf32>
    %467 = arith.negf %466 : vector<1x32xf32>
    %468 = math.exp %467 : vector<1x32xf32>
    %cst_109 = arith.constant 1.000000e+00 : f32
    %469 = vector.broadcast %cst_109 : f32 to vector<1x32xf32>
    %470 = arith.addf %469, %468 : vector<1x32xf32>
    %471 = arith.divf %469, %470 : vector<1x32xf32>
    %472 = vector.extract_strided_slice %459 {offsets = [0, 64], sizes = [1, 32], strides = [1, 1]} : vector<1x128xf32> to vector<1x32xf32>
    %473 = math.tanh %472 : vector<1x32xf32>
    %474 = vector.extract_strided_slice %459 {offsets = [0, 96], sizes = [1, 32], strides = [1, 1]} : vector<1x128xf32> to vector<1x32xf32>
    %475 = arith.negf %474 : vector<1x32xf32>
    %476 = math.exp %475 : vector<1x32xf32>
    %cst_110 = arith.constant 1.000000e+00 : f32
    %477 = vector.broadcast %cst_110 : f32 to vector<1x32xf32>
    %478 = arith.addf %477, %476 : vector<1x32xf32>
    %479 = arith.divf %477, %478 : vector<1x32xf32>
    %480 = arith.mulf %471, %453 : vector<1x32xf32>
    %481 = arith.mulf %465, %473 : vector<1x32xf32>
    %482 = arith.addf %480, %481 : vector<1x32xf32>
    %483 = math.tanh %482 : vector<1x32xf32>
    %484 = arith.mulf %479, %483 : vector<1x32xf32>
    %c7_111 = arith.constant 7 : index
    %c0_112 = arith.constant 0 : index
    %485 = vector.load %arg7[%c7_111, %c0_112] : memref<8x32xf32, #tpu.memory_space<vmem>>, vector<1x32xf32>
    tpu.vector_store %arg7[%c7_111, %c0_112], %484 {strides = array<i32>} : memref<8x32xf32, #tpu.memory_space<vmem>>, vector<1x32xf32>,
    %c0_113 = arith.constant 0 : index
    %c0_114 = arith.constant 0 : index
    %486 = vector.load %arg7[%c0_113, %c0_114] : memref<8x32xf32, #tpu.memory_space<vmem>>, vector<8x32xf32>
    %c0_115 = arith.constant 0 : index
    %c0_116 = arith.constant 0 : index
    %487 = vector.load %arg4[%c0_115, %c0_116] : memref<32x128xf32, #tpu.memory_space<vmem>>, vector<32x128xf32>
    %cst_117 = arith.constant dense<0.000000e+00> : vector<8x128xf32>
    %488 = tpu.matmul %486, %487, %cst_117 {dimension_numbers = #tpu.dot_dimension_numbers<[1], [0], [0], [1], [0, 0, 1, 1], [], []>} : vector<8x32xf32>, vector<32x128xf32>, vector<8x128xf32> -> vector<8x128xf32>
    %c0_118 = arith.constant 0 : index
    %c0_119 = arith.constant 0 : index
    %489 = vector.load %arg5[%c0_118, %c0_119] : memref<1x128xf32, #tpu.memory_space<vmem>>, vector<1x128xf32>
    %490 = vector.broadcast %489 : vector<1x128xf32> to vector<8x128xf32>
    %491 = arith.addf %488, %490 : vector<8x128xf32>
    %c0_120 = arith.constant 0 : index
    %c0_121 = arith.constant 0 : index
    %492 = vector.load %arg6[%c0_120, %c0_121] : memref<8x128xf32, #tpu.memory_space<vmem>>, vector<8x128xf32>
    tpu.vector_store %arg6[%c0_120, %c0_121], %491 {strides = array<i32>} : memref<8x128xf32, #tpu.memory_space<vmem>>, vector<8x128xf32>,
    return
  }
}

</mosaic_0001>

<llo_original>
// kernel: tpu_custom_call.1
$region0: #{tpu_custom_call.1}
  #allocation0 [shape = 'u32[]', space=smem, size = 0x4, offset = 0x4, fixed_abs, tag = 'smem constant byte address 0x4 - core index']
  #allocation1 [shape = 'u32[72,128]{1,0:T(1,128)}', space=vmem, size = 0x9000, scoped, tag = 'internal scratch']
  #allocation2 [shape = 'f32[8,32]{1,0:T(8,128)}', space=vmem, size = 0x1000, scoped, tag = 'scratch operand']
  %s0 = inlined_call_operand.hbm [shape: f32[8,32], index: 0, kind: input, shape index: {}]
  %s1 = inlined_call_operand.hbm [shape: f32[2,32,128], index: 1, kind: input, shape index: {}]
  %s2 = inlined_call_operand.hbm [shape: f32[2,32,128], index: 2, kind: input, shape index: {}]
  %s3 = inlined_call_operand.vmem [shape: f32[2,128], index: 3, kind: input, shape index: {}]
  %s4 = inlined_call_operand.hbm [shape: f32[32,128], index: 4, kind: input, shape index: {}]
  %s5 = inlined_call_operand.vmem [shape: f32[1,128], index: 5, kind: input, shape index: {}]
  %s6 = inlined_call_operand.hbm [shape: f32[8,128], index: 6, kind: output, shape index: {}]
  %s7 = sld [smem:[#allocation0]]
  $region50: #{tpu_custom_call.1} parent=0
    _
  %s9 = ssub.s32 1, %s7
  %s10 = scalar_select 0, %s9, %s7
  $region1: #{tpu_custom_call.1} parent=0
    #allocation3 [shape = 'u8[4096]{0}', space=vmem, size = 0x1000, scoped, tag = 'input window, operand 0, single buffered']
    #allocation4 [shape = 's32[1]{0}', space=sflag, size = 0x4, scoped, tag = 'scoped memory for tpu_custom_call.1']
    #allocation5 [shape = 's32[1]{0}', space=sflag, size = 0x4, scoped, tag = 'scoped memory for tpu_custom_call.1']
    #allocation6 [shape = 'u8[32768]{0}', space=vmem, size = 0x8000, scoped, tag = 'input window, operand 1, single buffered']
    #allocation7 [shape = 's32[1]{0}', space=sflag, size = 0x4, scoped, tag = 'scoped memory for tpu_custom_call.1']
    #allocation8 [shape = 'u8[32768]{0}', space=vmem, size = 0x8000, scoped, tag = 'input window, operand 2, single buffered']
    #allocation9 [shape = 'u8[16384]{0}', space=vmem, size = 0x4000, scoped, tag = 'input window, operand 4, single buffered']
    #allocation10 [shape = 's32[1]{0}', space=sflag, size = 0x4, scoped, tag = 'scoped memory for tpu_custom_call.1']
    #allocation11 [shape = 'u8[4096]{0}', space=vmem, size = 0x1000, scoped, tag = 'output window, operand 0, single buffered']
    %11 = vsyncpa [#allocation4], 0
    %12 = vsyncpa [#allocation7], 0
    %13 = vsyncpa [#allocation10], 0
    %14 = vsyncpa [#allocation5], 0
    // Predicated region
    $region2: #{tpu_custom_call.1} parent=1 // pred_check
      _
    $region3: #{tpu_custom_call.1} parent=1 // pred_check_branch
      %16 = sbr.rel (0) target = $region5
    $region4: #{tpu_custom_call.1} parent=1 // pred_region
      %18 = vsyncadd [#allocation4], 0
      %s20 = sshll.u32 %s0, 4
      %s21 = int_to_ptr.hbm [resolvable:$true] %s20
      %s22 = sshll.u32 [#allocation3], 4
      %s23 = int_to_ptr.vmem [resolvable:$true] %s22
      %25 = dma.hbm_to_vmem [thread:$0]  %s21, 128, %s23, [#allocation4]
    $region5: #{tpu_custom_call.1} parent=1 // pred_fallthru
      _
    // Predicated region
    $region6: #{tpu_custom_call.1} parent=1 // pred_check
      _
    $region7: #{tpu_custom_call.1} parent=1 // pred_check_branch
      %27 = sbr.rel (0) target = $region9
    $region8: #{tpu_custom_call.1} parent=1 // pred_region
      %29 = vsyncadd [#allocation7], 0
      %s30 = sshll.u32 %s1, 4
      %s31 = int_to_ptr.hbm [resolvable:$true] %s30
      %s32 = sshll.u32 [#allocation6], 4
      %s33 = int_to_ptr.vmem [resolvable:$true] %s32
      %38 = dma.hbm_to_vmem [thread:$0]  %s31, 1024, %s33, [#allocation7], 128, 128, 8
    $region9: #{tpu_custom_call.1} parent=1 // pred_fallthru
      _
    // Predicated region
    $region10: #{tpu_custom_call.1} parent=1 // pred_check
      _
    $region11: #{tpu_custom_call.1} parent=1 // pred_check_branch
      %40 = sbr.rel (0) target = $region13
    $region12: #{tpu_custom_call.1} parent=1 // pred_region
      %42 = vsyncadd [#allocation7], 0
      %s43 = sshll.u32 %s2, 4
      %s44 = int_to_ptr.hbm [resolvable:$true] %s43
      %s45 = sshll.u32 [#allocation8], 4
      %s46 = int_to_ptr.vmem [resolvable:$true] %s45
      %51 = dma.hbm_to_vmem [thread:$0]  %s44, 1024, %s46, [#allocation7], 128, 128, 8
    $region13: #{tpu_custom_call.1} parent=1 // pred_fallthru
      _
    // Predicated region
    $region14: #{tpu_custom_call.1} parent=1 // pred_check
      _
    $region15: #{tpu_custom_call.1} parent=1 // pred_check_branch
      %53 = sbr.rel (0) target = $region17
    $region16: #{tpu_custom_call.1} parent=1 // pred_region
      _
    $region17: #{tpu_custom_call.1} parent=1 // pred_fallthru
      _
    // Predicated region
    $region18: #{tpu_custom_call.1} parent=1 // pred_check
      _
    $region19: #{tpu_custom_call.1} parent=1 // pred_check_branch
      %55 = sbr.rel (0) target = $region21
    $region20: #{tpu_custom_call.1} parent=1 // pred_region
      %57 = vsyncadd [#allocation10], 0
      %s58 = sshll.u32 %s4, 4
      %s59 = int_to_ptr.hbm [resolvable:$true] %s58
      %s60 = sshll.u32 [#allocation9], 4
      %s61 = int_to_ptr.vmem [resolvable:$true] %s60
      %66 = dma.hbm_to_vmem [thread:$0]  %s59, 512, %s61, [#allocation10], 128, 128, 8
    $region21: #{tpu_custom_call.1} parent=1 // pred_fallthru
      _
    // Predicated region
    $region22: #{tpu_custom_call.1} parent=1 // pred_check
      _
    $region23: #{tpu_custom_call.1} parent=1 // pred_check_branch
      %68 = sbr.rel (0) target = $region25
    $region24: #{tpu_custom_call.1} parent=1 // pred_region
      _
    $region25: #{tpu_custom_call.1} parent=1 // pred_fallthru
      _
    // Predicated region
    $region26: #{tpu_custom_call.1} parent=1 // pred_check
      _
    $region27: #{tpu_custom_call.1} parent=1 // pred_check_branch
      %70 = sbr.rel (0) target = $region29
    $region28: #{tpu_custom_call.1} parent=1 // pred_region
      %72 = dma.done [#allocation4], 128
    $region29: #{tpu_custom_call.1} parent=1 // pred_fallthru
      _
    // Predicated region
    $region30: #{tpu_custom_call.1} parent=1 // pred_check
      _
    $region31: #{tpu_custom_call.1} parent=1 // pred_check_branch
      %74 = sbr.rel (0) target = $region33
    $region32: #{tpu_custom_call.1} parent=1 // pred_region
      %76 = dma.done [#allocation7], 1024
    $region33: #{tpu_custom_call.1} parent=1 // pred_fallthru
      _
    // Predicated region
    $region34: #{tpu_custom_call.1} parent=1 // pred_check
      _
    $region35: #{tpu_custom_call.1} parent=1 // pred_check_branch
      %78 = sbr.rel (0) target = $region37
    $region36: #{tpu_custom_call.1} parent=1 // pred_region
      %80 = dma.done [#allocation7], 1024
    $region37: #{tpu_custom_call.1} parent=1 // pred_fallthru
      _
    // Predicated region
    $region38: #{tpu_custom_call.1} parent=1 // pred_check
      _
    $region39: #{tpu_custom_call.1} parent=1 // pred_check_branch
      %82 = sbr.rel (0) target = $region41
    $region40: #{tpu_custom_call.1} parent=1 // pred_region
      %84 = dma.done [#allocation10], 512
    $region41: #{tpu_custom_call.1} parent=1 // pred_fallthru
      _
    %v85 = vld [vmem:[#allocation3] sm:$0xff]
    %v86 = vld [vmem:[#allocation6] sm:$0xff]
    %v87 = vld [vmem:[#allocation6 + $0x8] sm:$0xff]
    %v88 = vld [vmem:[#allocation6 + $0x10] sm:$0xff]
    %v89 = vld [vmem:[#allocation6 + $0x18] sm:$0xff]
    %v90 = vld [vmem:[#allocation8] sm:$0xff]
    %v91 = vld [vmem:[#allocation8 + $0x8] sm:$0xff]
    %v92 = vld [vmem:[#allocation8 + $0x10] sm:$0xff]
    %v93 = vld [vmem:[#allocation8 + $0x18] sm:$0xff]
    %v94 = vld [vmem:[%s3] sm:$0x1]
    %v95 = vperm.slane %v94, 0
    %vm96 = vcmask 261120
    %v98 = vsel %vm96, %v85, 0
    %100 = vmatpush.msra.mxu0 0.0
    %101 = vmatpush.msra.mxu0 0.0
    %102 = vmatpush.msra.mxu0 0.0
    %103 = vmatpush.msra.mxu0 0.0
    %104 = vmatpush.msra.mxu0 0.0
    %105 = vmatpush.msra.mxu0 0.0
    %106 = vmatpush.msra.mxu0 0.0
    %107 = vmatpush.msra.mxu0 0.0
    %108 = vmatpush.msra.mxu0 0.0
    %109 = vmatpush.msra.mxu0 0.0
    %110 = vmatpush.msra.mxu0 0.0
    %111 = vmatpush.msra.mxu0 0.0
    %112 = vmatpush.msra.mxu0 %v89
    %113 = vmatpush.msra.mxu0 %v88
    %114 = vmatpush.msra.mxu0 %v87
    %115 = vmatpush.msra.mxu0 %v86
    %116 = vmatmul.f32.gmra.mxu0 %v98
    %v117 = vpop.f32.mrf.mxu0
    %v118 = vadd.f32 %v95, %v117
    %119 = vdwg.mxu0
    %v121 = vsel %vm96, 0.0, 0
    %123 = vmatpush.msra.mxu0 0.0
    %124 = vmatpush.msra.mxu0 0.0
    %125 = vmatpush.msra.mxu0 0.0
    %126 = vmatpush.msra.mxu0 0.0
    %127 = vmatpush.msra.mxu0 0.0
    %128 = vmatpush.msra.mxu0 0.0
    %129 = vmatpush.msra.mxu0 0.0
    %130 = vmatpush.msra.mxu0 0.0
    %131 = vmatpush.msra.mxu0 0.0
    %132 = vmatpush.msra.mxu0 0.0
    %133 = vmatpush.msra.mxu0 0.0
    %134 = vmatpush.msra.mxu0 0.0
    %135 = vmatpush.msra.mxu0 %v93
    %136 = vmatpush.msra.mxu0 %v92
    %137 = vmatpush.msra.mxu0 %v91
    %138 = vmatpush.msra.mxu0 %v90
    %139 = vmatmul.f32.gmra.mxu0 %v121
    %v140 = vpop.f32.mrf.mxu0
    %v141 = vadd.f32 0.0, %v140
    %142 = vdwg.mxu0
    %v143 = vadd.f32 %v118, %v141
    %v144 = vxor.u32 %v143, 2147483648
    %v145 = vmul.f32 %v144, 1.442695
    %v146 = vpow.pop %v145
    %v147 = vadd.f32 %v146, 1.0
    %v148 = vrcp.pop %v147
    %v149 = vmul.f32 %v147, %v148
    %v150 = vsub.f32 1.0, %v149
    %v151 = vmul.f32 %v148, %v150
    %v152 = vadd.f32 %v148, %v151
    %vm153 = vweird.f32 %v147
    %vm154 = vweird.f32 %v148
    %vm155 = vmor %vm153, %vm154
    %v156 = vsel %vm155, %v148, %v152
    %v157 = vand.u32 2147483647, %v147
    %vm158 = vcmp.eq.f32.partialorder %v157, 8.507059e+37
    %v159 = vand.u32 %v147, 2147483648
    %v160 = vor.u32 1.1754944e-38, %v159
    %v161 = vsel %vm158, %v160, %v156
    %v162 = vmul.f32 1.0, %v161
    %v163 = vtanh.pop %v143
    %v164 = vmul.f32 %v162, 0.0
    %166 = vrot.lane.b32.xlu0 %v163, 64
    %v167 = vpop.permute.xlu0 %166
    %v169 = vmul.f32 %v162, %v167
    %171 = vrot.lane.b32.xlu0 %v169, 32
    %v172 = vpop.permute.xlu0 %171
    %v174 = vadd.f32 %v164, %v172
    %v175 = vtanh.pop %v174
    %177 = vrot.lane.b32.xlu0 %v175, 64
    %v178 = vpop.permute.xlu0 %177
    %v180 = vmul.f32 %v162, %v178
    %182 = vrot.lane.b32.xlu0 %v180, 32
    %v183 = vpop.permute.xlu0 %182
    %vm185 = vcmask 253952
    %186 = vst.msk [vmem:[#allocation2] sm:$0x1] %vm185, %v183
    %v187 = vsel %vm96, %v183, 0
    %189 = vmatpush.msra.mxu0 0.0
    %190 = vmatpush.msra.mxu0 0.0
    %191 = vmatpush.msra.mxu0 0.0
    %192 = vmatpush.msra.mxu0 0.0
    %193 = vmatpush.msra.mxu0 0.0
    %194 = vmatpush.msra.mxu0 0.0
    %195 = vmatpush.msra.mxu0 0.0
    %196 = vmatpush.msra.mxu0 0.0
    %197 = vmatpush.msra.mxu0 0.0
    %198 = vmatpush.msra.mxu0 0.0
    %199 = vmatpush.msra.mxu0 0.0
    %200 = vmatpush.msra.mxu0 0.0
    %201 = vmatpush.msra.mxu0 %v93
    %202 = vmatpush.msra.mxu0 %v92
    %203 = vmatpush.msra.mxu0 %v91
    %204 = vmatpush.msra.mxu0 %v90
    %205 = vmatmul.f32.gmra.mxu0 %v187
    %v206 = vpop.f32.mrf.mxu0
    %v207 = vadd.f32 0.0, %v206
    %208 = vdwg.mxu0
    %v210 = vrot.slane %v207, 7
    %v212 = vadd.f32 %v118, %v210
    %v213 = vxor.u32 %v212, 2147483648
    %v214 = vmul.f32 %v213, 1.442695
    %v215 = vpow.pop %v214
    %v216 = vadd.f32 %v215, 1.0
    %v217 = vrcp.pop %v216
    %v218 = vmul.f32 %v216, %v217
    %v219 = vsub.f32 1.0, %v218
    %v220 = vmul.f32 %v217, %v219
    %v221 = vadd.f32 %v217, %v220
    %vm222 = vweird.f32 %v216
    %vm223 = vweird.f32 %v217
    %vm224 = vmor %vm222, %vm223
    %v225 = vsel %vm224, %v217, %v221
    %v226 = vand.u32 2147483647, %v216
    %vm227 = vcmp.eq.f32.partialorder %v226, 8.507059e+37
    %v228 = vand.u32 %v216, 2147483648
    %v229 = vor.u32 1.1754944e-38, %v228
    %v230 = vsel %vm227, %v229, %v225
    %v231 = vmul.f32 1.0, %v230
    %v232 = vtanh.pop %v212
    %v234 = vrot.slane %v174, 7
    %v236 = vmul.f32 %v231, %v234
    %238 = vrot.lane.b32.xlu0 %v232, 64
    %v239 = vpop.permute.xlu0 %238
    %v241 = vmul.f32 %v231, %v239
    %243 = vrot.lane.b32.xlu0 %v241, 32
    %v244 = vpop.permute.xlu0 %243
    %v246 = vadd.f32 %v236, %v244
    %v247 = vtanh.pop %v246
    %249 = vrot.lane.b32.xlu0 %v247, 64
    %v250 = vpop.permute.xlu0 %249
    %v252 = vmul.f32 %v231, %v250
    %254 = vrot.lane.b32.xlu0 %v252, 32
    %v255 = vpop.permute.xlu0 %254
    %vm257 = vcmask 254977
    %258 = vst.msk [vmem:[#allocation2] sm:$0x2] %vm257, %v255
    %v259 = vrot.slane %v252, 1
    %260 = vrot.lane.b32.xlu0 %v259, 32
    %v261 = vpop.permute.xlu0 %260
    %v262 = vsel %vm96, %v261, 0
    %264 = vmatpush.msra.mxu0 0.0
    %265 = vmatpush.msra.mxu0 0.0
    %266 = vmatpush.msra.mxu0 0.0
    %267 = vmatpush.msra.mxu0 0.0
    %268 = vmatpush.msra.mxu0 0.0
    %269 = vmatpush.msra.mxu0 0.0
    %270 = vmatpush.msra.mxu0 0.0
    %271 = vmatpush.msra.mxu0 0.0
    %272 = vmatpush.msra.mxu0 0.0
    %273 = vmatpush.msra.mxu0 0.0
    %274 = vmatpush.msra.mxu0 0.0
    %275 = vmatpush.msra.mxu0 0.0
    %276 = vmatpush.msra.mxu0 %v93
    %277 = vmatpush.msra.mxu0 %v92
    %278 = vmatpush.msra.mxu0 %v91
    %279 = vmatpush.msra.mxu0 %v90
    %280 = vmatmul.f32.gmra.mxu0 %v262
    %v281 = vpop.f32.mrf.mxu0
    %v282 = vadd.f32 0.0, %v281
    %283 = vdwg.mxu0
    %v285 = vrot.slane %v282, 6
    %v287 = vadd.f32 %v118, %v285
    %v288 = vxor.u32 %v287, 2147483648
    %v289 = vmul.f32 %v288, 1.442695
    %v290 = vpow.pop %v289
    %v291 = vadd.f32 %v290, 1.0
    %v292 = vrcp.pop %v291
    %v293 = vmul.f32 %v291, %v292
    %v294 = vsub.f32 1.0, %v293
    %v295 = vmul.f32 %v292, %v294
    %v296 = vadd.f32 %v292, %v295
    %vm297 = vweird.f32 %v291
    %vm298 = vweird.f32 %v292
    %vm299 = vmor %vm297, %vm298
    %v300 = vsel %vm299, %v292, %v296
    %v301 = vand.u32 2147483647, %v291
    %vm302 = vcmp.eq.f32.partialorder %v301, 8.507059e+37
    %v303 = vand.u32 %v291, 2147483648
    %v304 = vor.u32 1.1754944e-38, %v303
    %v305 = vsel %vm302, %v304, %v300
    %v306 = vmul.f32 1.0, %v305
    %v307 = vtanh.pop %v287
    %v309 = vrot.slane %v246, 7
    %v311 = vmul.f32 %v306, %v309
    %313 = vrot.lane.b32.xlu0 %v307, 64
    %v314 = vpop.permute.xlu0 %313
    %v316 = vmul.f32 %v306, %v314
    %318 = vrot.lane.b32.xlu0 %v316, 32
    %v319 = vpop.permute.xlu0 %318
    %v321 = vadd.f32 %v311, %v319
    %v322 = vtanh.pop %v321
    %324 = vrot.lane.b32.xlu0 %v322, 64
    %v325 = vpop.permute.xlu0 %324
    %v327 = vmul.f32 %v306, %v325
    %329 = vrot.lane.b32.xlu0 %v327, 32
    %v330 = vpop.permute.xlu0 %329
    %vm332 = vcmask 256002
    %333 = vst.msk [vmem:[#allocation2] sm:$0x4] %vm332, %v330
    %v334 = vrot.slane %v327, 2
    %335 = vrot.lane.b32.xlu0 %v334, 32
    %v336 = vpop.permute.xlu0 %335
    %v337 = vsel %vm96, %v336, 0
    %339 = vmatpush.msra.mxu0 0.0
    %340 = vmatpush.msra.mxu0 0.0
    %341 = vmatpush.msra.mxu0 0.0
    %342 = vmatpush.msra.mxu0 0.0
    %343 = vmatpush.msra.mxu0 0.0
    %344 = vmatpush.msra.mxu0 0.0
    %345 = vmatpush.msra.mxu0 0.0
    %346 = vmatpush.msra.mxu0 0.0
    %347 = vmatpush.msra.mxu0 0.0
    %348 = vmatpush.msra.mxu0 0.0
    %349 = vmatpush.msra.mxu0 0.0
    %350 = vmatpush.msra.mxu0 0.0
    %351 = vmatpush.msra.mxu0 %v93
    %352 = vmatpush.msra.mxu0 %v92
    %353 = vmatpush.msra.mxu0 %v91
    %354 = vmatpush.msra.mxu0 %v90
    %355 = vmatmul.f32.gmra.mxu0 %v337
    %v356 = vpop.f32.mrf.mxu0
    %v357 = vadd.f32 0.0, %v356
    %358 = vdwg.mxu0
    %v360 = vrot.slane %v357, 5
    %v362 = vadd.f32 %v118, %v360
    %v363 = vxor.u32 %v362, 2147483648
    %v364 = vmul.f32 %v363, 1.442695
    %v365 = vpow.pop %v364
    %v366 = vadd.f32 %v365, 1.0
    %v367 = vrcp.pop %v366
    %v368 = vmul.f32 %v366, %v367
    %v369 = vsub.f32 1.0, %v368
    %v370 = vmul.f32 %v367, %v369
    %v371 = vadd.f32 %v367, %v370
    %vm372 = vweird.f32 %v366
    %vm373 = vweird.f32 %v367
    %vm374 = vmor %vm372, %vm373
    %v375 = vsel %vm374, %v367, %v371
    %v376 = vand.u32 2147483647, %v366
    %vm377 = vcmp.eq.f32.partialorder %v376, 8.507059e+37
    %v378 = vand.u32 %v366, 2147483648
    %v379 = vor.u32 1.1754944e-38, %v378
    %v380 = vsel %vm377, %v379, %v375
    %v381 = vmul.f32 1.0, %v380
    %v382 = vtanh.pop %v362
    %v384 = vrot.slane %v321, 7
    %v386 = vmul.f32 %v381, %v384
    %388 = vrot.lane.b32.xlu0 %v382, 64
    %v389 = vpop.permute.xlu0 %388
    %v391 = vmul.f32 %v381, %v389
    %393 = vrot.lane.b32.xlu0 %v391, 32
    %v394 = vpop.permute.xlu0 %393
    %v396 = vadd.f32 %v386, %v394
    %v397 = vtanh.pop %v396
    %399 = vrot.lane.b32.xlu0 %v397, 64
    %v400 = vpop.permute.xlu0 %399
    %v402 = vmul.f32 %v381, %v400
    %404 = vrot.lane.b32.xlu0 %v402, 32
    %v405 = vpop.permute.xlu0 %404
    %vm407 = vcmask 257027
    %408 = vst.msk [vmem:[#allocation2] sm:$0x8] %vm407, %v405
    %v409 = vrot.slane %v402, 3
    %410 = vrot.lane.b32.xlu0 %v409, 32
    %v411 = vpop.permute.xlu0 %410
    %v412 = vsel %vm96, %v411, 0
    %414 = vmatpush.msra.mxu0 0.0
    %415 = vmatpush.msra.mxu0 0.0
    %416 = vmatpush.msra.mxu0 0.0
    %417 = vmatpush.msra.mxu0 0.0
    %418 = vmatpush.msra.mxu0 0.0
    %419 = vmatpush.msra.mxu0 0.0
    %420 = vmatpush.msra.mxu0 0.0
    %421 = vmatpush.msra.mxu0 0.0
    %422 = vmatpush.msra.mxu0 0.0
    %423 = vmatpush.msra.mxu0 0.0
    %424 = vmatpush.msra.mxu0 0.0
    %425 = vmatpush.msra.mxu0 0.0
    %426 = vmatpush.msra.mxu0 %v93
    %427 = vmatpush.msra.mxu0 %v92
    %428 = vmatpush.msra.mxu0 %v91
    %429 = vmatpush.msra.mxu0 %v90
    %430 = vmatmul.f32.gmra.mxu0 %v412
    %v431 = vpop.f32.mrf.mxu0
    %v432 = vadd.f32 0.0, %v431
    %433 = vdwg.mxu0
    %v435 = vrot.slane %v432, 4
    %v437 = vadd.f32 %v118, %v435
    %v438 = vxor.u32 %v437, 2147483648
    %v439 = vmul.f32 %v438, 1.442695
    %v440 = vpow.pop %v439
    %v441 = vadd.f32 %v440, 1.0
    %v442 = vrcp.pop %v441
    %v443 = vmul.f32 %v441, %v442
    %v444 = vsub.f32 1.0, %v443
    %v445 = vmul.f32 %v442, %v444
    %v446 = vadd.f32 %v442, %v445
    %vm447 = vweird.f32 %v441
    %vm448 = vweird.f32 %v442
    %vm449 = vmor %vm447, %vm448
    %v450 = vsel %vm449, %v442, %v446
    %v451 = vand.u32 2147483647, %v441
    %vm452 = vcmp.eq.f32.partialorder %v451, 8.507059e+37
    %v453 = vand.u32 %v441, 2147483648
    %v454 = vor.u32 1.1754944e-38, %v453
    %v455 = vsel %vm452, %v454, %v450
    %v456 = vmul.f32 1.0, %v455
    %v457 = vtanh.pop %v437
    %v459 = vrot.slane %v396, 7
    %v461 = vmul.f32 %v456, %v459
    %463 = vrot.lane.b32.xlu0 %v457, 64
    %v464 = vpop.permute.xlu0 %463
    %v466 = vmul.f32 %v456, %v464
    %468 = vrot.lane.b32.xlu0 %v466, 32
    %v469 = vpop.permute.xlu0 %468
    %v471 = vadd.f32 %v461, %v469
    %v472 = vtanh.pop %v471
    %474 = vrot.lane.b32.xlu0 %v472, 64
    %v475 = vpop.permute.xlu0 %474
    %v477 = vmul.f32 %v456, %v475
    %479 = vrot.lane.b32.xlu0 %v477, 32
    %v480 = vpop.permute.xlu0 %479
    %vm482 = vcmask 258052
    %483 = vst.msk [vmem:[#allocation2] sm:$0x10] %vm482, %v480
    %v484 = vrot.slane %v477, 4
    %485 = vrot.lane.b32.xlu0 %v484, 32
    %v486 = vpop.permute.xlu0 %485
    %v487 = vsel %vm96, %v486, 0
    %489 = vmatpush.msra.mxu0 0.0
    %490 = vmatpush.msra.mxu0 0.0
    %491 = vmatpush.msra.mxu0 0.0
    %492 = vmatpush.msra.mxu0 0.0
    %493 = vmatpush.msra.mxu0 0.0
    %494 = vmatpush.msra.mxu0 0.0
    %495 = vmatpush.msra.mxu0 0.0
    %496 = vmatpush.msra.mxu0 0.0
    %497 = vmatpush.msra.mxu0 0.0
    %498 = vmatpush.msra.mxu0 0.0
    %499 = vmatpush.msra.mxu0 0.0
    %500 = vmatpush.msra.mxu0 0.0
    %501 = vmatpush.msra.mxu0 %v93
    %502 = vmatpush.msra.mxu0 %v92
    %503 = vmatpush.msra.mxu0 %v91
    %504 = vmatpush.msra.mxu0 %v90
    %505 = vmatmul.f32.gmra.mxu0 %v487
    %v506 = vpop.f32.mrf.mxu0
    %v507 = vadd.f32 0.0, %v506
    %508 = vdwg.mxu0
    %v510 = vrot.slane %v507, 3
    %v512 = vadd.f32 %v118, %v510
    %v513 = vxor.u32 %v512, 2147483648
    %v514 = vmul.f32 %v513, 1.442695
    %v515 = vpow.pop %v514
    %v516 = vadd.f32 %v515, 1.0
    %v517 = vrcp.pop %v516
    %v518 = vmul.f32 %v516, %v517
    %v519 = vsub.f32 1.0, %v518
    %v520 = vmul.f32 %v517, %v519
    %v521 = vadd.f32 %v517, %v520
    %vm522 = vweird.f32 %v516
    %vm523 = vweird.f32 %v517
    %vm524 = vmor %vm522, %vm523
    %v525 = vsel %vm524, %v517, %v521
    %v526 = vand.u32 2147483647, %v516
    %vm527 = vcmp.eq.f32.partialorder %v526, 8.507059e+37
    %v528 = vand.u32 %v516, 2147483648
    %v529 = vor.u32 1.1754944e-38, %v528
    %v530 = vsel %vm527, %v529, %v525
    %v531 = vmul.f32 1.0, %v530
    %v532 = vtanh.pop %v512
    %v534 = vrot.slane %v471, 7
    %v536 = vmul.f32 %v531, %v534
    %538 = vrot.lane.b32.xlu0 %v532, 64
    %v539 = vpop.permute.xlu0 %538
    %v541 = vmul.f32 %v531, %v539
    %543 = vrot.lane.b32.xlu0 %v541, 32
    %v544 = vpop.permute.xlu0 %543
    %v546 = vadd.f32 %v536, %v544
    %v547 = vtanh.pop %v546
    %549 = vrot.lane.b32.xlu0 %v547, 64
    %v550 = vpop.permute.xlu0 %549
    %v552 = vmul.f32 %v531, %v550
    %554 = vrot.lane.b32.xlu0 %v552, 32
    %v555 = vpop.permute.xlu0 %554
    %vm557 = vcmask 259077
    %558 = vst.msk [vmem:[#allocation2] sm:$0x20] %vm557, %v555
    %v559 = vrot.slane %v552, 5
    %560 = vrot.lane.b32.xlu0 %v559, 32
    %v561 = vpop.permute.xlu0 %560
    %v562 = vsel %vm96, %v561, 0
    %564 = vmatpush.msra.mxu0 0.0
    %565 = vmatpush.msra.mxu0 0.0
    %566 = vmatpush.msra.mxu0 0.0
    %567 = vmatpush.msra.mxu0 0.0
    %568 = vmatpush.msra.mxu0 0.0
    %569 = vmatpush.msra.mxu0 0.0
    %570 = vmatpush.msra.mxu0 0.0
    %571 = vmatpush.msra.mxu0 0.0
    %572 = vmatpush.msra.mxu0 0.0
    %573 = vmatpush.msra.mxu0 0.0
    %574 = vmatpush.msra.mxu0 0.0
    %575 = vmatpush.msra.mxu0 0.0
    %576 = vmatpush.msra.mxu0 %v93
    %577 = vmatpush.msra.mxu0 %v92
    %578 = vmatpush.msra.mxu0 %v91
    %579 = vmatpush.msra.mxu0 %v90
    %580 = vmatmul.f32.gmra.mxu0 %v562
    %v581 = vpop.f32.mrf.mxu0
    %v582 = vadd.f32 0.0, %v581
    %583 = vdwg.mxu0
    %v585 = vrot.slane %v582, 2
    %v587 = vadd.f32 %v118, %v585
    %v588 = vxor.u32 %v587, 2147483648
    %v589 = vmul.f32 %v588, 1.442695
    %v590 = vpow.pop %v589
    %v591 = vadd.f32 %v590, 1.0
    %v592 = vrcp.pop %v591
    %v593 = vmul.f32 %v591, %v592
    %v594 = vsub.f32 1.0, %v593
    %v595 = vmul.f32 %v592, %v594
    %v596 = vadd.f32 %v592, %v595
    %vm597 = vweird.f32 %v591
    %vm598 = vweird.f32 %v592
    %vm599 = vmor %vm597, %vm598
    %v600 = vsel %vm599, %v592, %v596
    %v601 = vand.u32 2147483647, %v591
    %vm602 = vcmp.eq.f32.partialorder %v601, 8.507059e+37
    %v603 = vand.u32 %v591, 2147483648
    %v604 = vor.u32 1.1754944e-38, %v603
    %v605 = vsel %vm602, %v604, %v600
    %v606 = vmul.f32 1.0, %v605
    %v607 = vtanh.pop %v587
    %v609 = vrot.slane %v546, 7
    %v611 = vmul.f32 %v606, %v609
    %613 = vrot.lane.b32.xlu0 %v607, 64
    %v614 = vpop.permute.xlu0 %613
    %v616 = vmul.f32 %v606, %v614
    %618 = vrot.lane.b32.xlu0 %v616, 32
    %v619 = vpop.permute.xlu0 %618
    %v621 = vadd.f32 %v611, %v619
    %v622 = vtanh.pop %v621
    %624 = vrot.lane.b32.xlu0 %v622, 64
    %v625 = vpop.permute.xlu0 %624
    %v627 = vmul.f32 %v606, %v625
    %629 = vrot.lane.b32.xlu0 %v627, 32
    %v630 = vpop.permute.xlu0 %629
    %vm632 = vcmask 260102
    %633 = vst.msk [vmem:[#allocation2] sm:$0x40] %vm632, %v630
    %v634 = vrot.slane %v627, 6
    %635 = vrot.lane.b32.xlu0 %v634, 32
    %v636 = vpop.permute.xlu0 %635
    %v637 = vsel %vm96, %v636, 0
    %639 = vmatpush.msra.mxu0 0.0
    %640 = vmatpush.msra.mxu0 0.0
    %641 = vmatpush.msra.mxu0 0.0
    %642 = vmatpush.msra.mxu0 0.0
    %643 = vmatpush.msra.mxu0 0.0
    %644 = vmatpush.msra.mxu0 0.0
    %645 = vmatpush.msra.mxu0 0.0
    %646 = vmatpush.msra.mxu0 0.0
    %647 = vmatpush.msra.mxu0 0.0
    %648 = vmatpush.msra.mxu0 0.0
    %649 = vmatpush.msra.mxu0 0.0
    %650 = vmatpush.msra.mxu0 0.0
    %651 = vmatpush.msra.mxu0 %v93
    %652 = vmatpush.msra.mxu0 %v92
    %653 = vmatpush.msra.mxu0 %v91
    %654 = vmatpush.msra.mxu0 %v90
    %655 = vmatmul.f32.gmra.mxu0 %v637
    %v656 = vpop.f32.mrf.mxu0
    %v657 = vadd.f32 0.0, %v656
    %658 = vdwg.mxu0
    %v660 = vrot.slane %v657, 1
    %v662 = vadd.f32 %v118, %v660
    %v663 = vxor.u32 %v662, 2147483648
    %v664 = vmul.f32 %v663, 1.442695
    %v665 = vpow.pop %v664
    %v666 = vadd.f32 %v665, 1.0
    %v667 = vrcp.pop %v666
    %v668 = vmul.f32 %v666, %v667
    %v669 = vsub.f32 1.0, %v668
    %v670 = vmul.f32 %v667, %v669
    %v671 = vadd.f32 %v667, %v670
    %vm672 = vweird.f32 %v666
    %vm673 = vweird.f32 %v667
    %vm674 = vmor %vm672, %vm673
    %v675 = vsel %vm674, %v667, %v671
    %v676 = vand.u32 2147483647, %v666
    %vm677 = vcmp.eq.f32.partialorder %v676, 8.507059e+37
    %v678 = vand.u32 %v666, 2147483648
    %v679 = vor.u32 1.1754944e-38, %v678
    %v680 = vsel %vm677, %v679, %v675
    %v681 = vmul.f32 1.0, %v680
    %v682 = vtanh.pop %v662
    %v684 = vrot.slane %v621, 7
    %v686 = vmul.f32 %v681, %v684
    %688 = vrot.lane.b32.xlu0 %v682, 64
    %v689 = vpop.permute.xlu0 %688
    %v691 = vmul.f32 %v681, %v689
    %693 = vrot.lane.b32.xlu0 %v691, 32
    %v694 = vpop.permute.xlu0 %693
    %v696 = vadd.f32 %v686, %v694
    %v697 = vtanh.pop %v696
    %699 = vrot.lane.b32.xlu0 %v697, 64
    %v700 = vpop.permute.xlu0 %699
    %v702 = vmul.f32 %v681, %v700
    %704 = vrot.lane.b32.xlu0 %v702, 32
    %v705 = vpop.permute.xlu0 %704
    %vm707 = vcmask 261127
    %708 = vst.msk [vmem:[#allocation2] sm:$0x80] %vm707, %v705
    %v709 = vld [vmem:[#allocation2] sm:$0xff]
    %s710 = scalar_lea.vmem [#allocation6], 32
    %v711 = vld [vmem:[%s710] sm:$0xff]
    %v712 = vld [vmem:[%s710 + $0x8] sm:$0xff]
    %v713 = vld [vmem:[%s710 + $0x10] sm:$0xff]
    %v714 = vld [vmem:[%s710 + $0x18] sm:$0xff]
    %s715 = scalar_lea.vmem [#allocation8], 32
    %v716 = vld [vmem:[%s715] sm:$0xff]
    %v717 = vld [vmem:[%s715 + $0x8] sm:$0xff]
    %v718 = vld [vmem:[%s715 + $0x10] sm:$0xff]
    %v719 = vld [vmem:[%s715 + $0x18] sm:$0xff]
    %v720 = vld [vmem:[%s3 + $0x1] sm:$0x1]
    %v721 = vperm.slane %v720, 0
    %v723 = vsel %vm96, %v709, 0
    %725 = vmatpush.msra.mxu0 0.0
    %726 = vmatpush.msra.mxu0 0.0
    %727 = vmatpush.msra.mxu0 0.0
    %728 = vmatpush.msra.mxu0 0.0
    %729 = vmatpush.msra.mxu0 0.0
    %730 = vmatpush.msra.mxu0 0.0
    %731 = vmatpush.msra.mxu0 0.0
    %732 = vmatpush.msra.mxu0 0.0
    %733 = vmatpush.msra.mxu0 0.0
    %734 = vmatpush.msra.mxu0 0.0
    %735 = vmatpush.msra.mxu0 0.0
    %736 = vmatpush.msra.mxu0 0.0
    %737 = vmatpush.msra.mxu0 %v714
    %738 = vmatpush.msra.mxu0 %v713
    %739 = vmatpush.msra.mxu0 %v712
    %740 = vmatpush.msra.mxu0 %v711
    %741 = vmatmul.f32.gmra.mxu0 %v723
    %v742 = vpop.f32.mrf.mxu0
    %v743 = vadd.f32 %v721, %v742
    %744 = vdwg.mxu0
    %745 = vmatpush.msra.mxu0 0.0
    %746 = vmatpush.msra.mxu0 0.0
    %747 = vmatpush.msra.mxu0 0.0
    %748 = vmatpush.msra.mxu0 0.0
    %749 = vmatpush.msra.mxu0 0.0
    %750 = vmatpush.msra.mxu0 0.0
    %751 = vmatpush.msra.mxu0 0.0
    %752 = vmatpush.msra.mxu0 0.0
    %753 = vmatpush.msra.mxu0 0.0
    %754 = vmatpush.msra.mxu0 0.0
    %755 = vmatpush.msra.mxu0 0.0
    %756 = vmatpush.msra.mxu0 0.0
    %757 = vmatpush.msra.mxu0 %v719
    %758 = vmatpush.msra.mxu0 %v718
    %759 = vmatpush.msra.mxu0 %v717
    %760 = vmatpush.msra.mxu0 %v716
    %761 = vmatmul.f32.gmra.mxu0 %v121
    %v762 = vpop.f32.mrf.mxu0
    %v763 = vadd.f32 0.0, %v762
    %764 = vdwg.mxu0
    %v765 = vadd.f32 %v743, %v763
    %v766 = vxor.u32 %v765, 2147483648
    %v767 = vmul.f32 %v766, 1.442695
    %v768 = vpow.pop %v767
    %v769 = vadd.f32 %v768, 1.0
    %v770 = vrcp.pop %v769
    %v771 = vmul.f32 %v769, %v770
    %v772 = vsub.f32 1.0, %v771
    %v773 = vmul.f32 %v770, %v772
    %v774 = vadd.f32 %v770, %v773
    %vm775 = vweird.f32 %v769
    %vm776 = vweird.f32 %v770
    %vm777 = vmor %vm775, %vm776
    %v778 = vsel %vm777, %v770, %v774
    %v779 = vand.u32 2147483647, %v769
    %vm780 = vcmp.eq.f32.partialorder %v779, 8.507059e+37
    %v781 = vand.u32 %v769, 2147483648
    %v782 = vor.u32 1.1754944e-38, %v781
    %v783 = vsel %vm780, %v782, %v778
    %v784 = vmul.f32 1.0, %v783
    %v785 = vtanh.pop %v765
    %v786 = vmul.f32 %v784, 0.0
    %788 = vrot.lane.b32.xlu0 %v785, 64
    %v789 = vpop.permute.xlu0 %788
    %v791 = vmul.f32 %v784, %v789
    %793 = vrot.lane.b32.xlu0 %v791, 32
    %v794 = vpop.permute.xlu0 %793
    %v796 = vadd.f32 %v786, %v794
    %v797 = vtanh.pop %v796
    %799 = vrot.lane.b32.xlu0 %v797, 64
    %v800 = vpop.permute.xlu0 %799
    %v802 = vmul.f32 %v784, %v800
    %804 = vrot.lane.b32.xlu0 %v802, 32
    %v805 = vpop.permute.xlu0 %804
    %807 = vst.msk [vmem:[#allocation2] sm:$0x1] %vm185, %v805
    %v808 = vsel %vm96, %v805, 0
    %810 = vmatpush.msra.mxu0 0.0
    %811 = vmatpush.msra.mxu0 0.0
    %812 = vmatpush.msra.mxu0 0.0
    %813 = vmatpush.msra.mxu0 0.0
    %814 = vmatpush.msra.mxu0 0.0
    %815 = vmatpush.msra.mxu0 0.0
    %816 = vmatpush.msra.mxu0 0.0
    %817 = vmatpush.msra.mxu0 0.0
    %818 = vmatpush.msra.mxu0 0.0
    %819 = vmatpush.msra.mxu0 0.0
    %820 = vmatpush.msra.mxu0 0.0
    %821 = vmatpush.msra.mxu0 0.0
    %822 = vmatpush.msra.mxu0 %v719
    %823 = vmatpush.msra.mxu0 %v718
    %824 = vmatpush.msra.mxu0 %v717
    %825 = vmatpush.msra.mxu0 %v716
    %826 = vmatmul.f32.gmra.mxu0 %v808
    %v827 = vpop.f32.mrf.mxu0
    %v828 = vadd.f32 0.0, %v827
    %829 = vdwg.mxu0
    %v831 = vrot.slane %v828, 7
    %v833 = vadd.f32 %v743, %v831
    %v834 = vxor.u32 %v833, 2147483648
    %v835 = vmul.f32 %v834, 1.442695
    %v836 = vpow.pop %v835
    %v837 = vadd.f32 %v836, 1.0
    %v838 = vrcp.pop %v837
    %v839 = vmul.f32 %v837, %v838
    %v840 = vsub.f32 1.0, %v839
    %v841 = vmul.f32 %v838, %v840
    %v842 = vadd.f32 %v838, %v841
    %vm843 = vweird.f32 %v837
    %vm844 = vweird.f32 %v838
    %vm845 = vmor %vm843, %vm844
    %v846 = vsel %vm845, %v838, %v842
    %v847 = vand.u32 2147483647, %v837
    %vm848 = vcmp.eq.f32.partialorder %v847, 8.507059e+37
    %v849 = vand.u32 %v837, 2147483648
    %v850 = vor.u32 1.1754944e-38, %v849
    %v851 = vsel %vm848, %v850, %v846
    %v852 = vmul.f32 1.0, %v851
    %v853 = vtanh.pop %v833
    %v855 = vrot.slane %v796, 7
    %v857 = vmul.f32 %v852, %v855
    %859 = vrot.lane.b32.xlu0 %v853, 64
    %v860 = vpop.permute.xlu0 %859
    %v862 = vmul.f32 %v852, %v860
    %864 = vrot.lane.b32.xlu0 %v862, 32
    %v865 = vpop.permute.xlu0 %864
    %v867 = vadd.f32 %v857, %v865
    %v868 = vtanh.pop %v867
    %870 = vrot.lane.b32.xlu0 %v868, 64
    %v871 = vpop.permute.xlu0 %870
    %v873 = vmul.f32 %v852, %v871
    %875 = vrot.lane.b32.xlu0 %v873, 32
    %v876 = vpop.permute.xlu0 %875
    %878 = vst.msk [vmem:[#allocation2] sm:$0x2] %vm257, %v876
    %v879 = vrot.slane %v873, 1
    %880 = vrot.lane.b32.xlu0 %v879, 32
    %v881 = vpop.permute.xlu0 %880
    %v882 = vsel %vm96, %v881, 0
    %884 = vmatpush.msra.mxu0 0.0
    %885 = vmatpush.msra.mxu0 0.0
    %886 = vmatpush.msra.mxu0 0.0
    %887 = vmatpush.msra.mxu0 0.0
    %888 = vmatpush.msra.mxu0 0.0
    %889 = vmatpush.msra.mxu0 0.0
    %890 = vmatpush.msra.mxu0 0.0
    %891 = vmatpush.msra.mxu0 0.0
    %892 = vmatpush.msra.mxu0 0.0
    %893 = vmatpush.msra.mxu0 0.0
    %894 = vmatpush.msra.mxu0 0.0
    %895 = vmatpush.msra.mxu0 0.0
    %896 = vmatpush.msra.mxu0 %v719
    %897 = vmatpush.msra.mxu0 %v718
    %898 = vmatpush.msra.mxu0 %v717
    %899 = vmatpush.msra.mxu0 %v716
    %900 = vmatmul.f32.gmra.mxu0 %v882
    %v901 = vpop.f32.mrf.mxu0
    %v902 = vadd.f32 0.0, %v901
    %903 = vdwg.mxu0
    %v905 = vrot.slane %v902, 6
    %v907 = vadd.f32 %v743, %v905
    %v908 = vxor.u32 %v907, 2147483648
    %v909 = vmul.f32 %v908, 1.442695
    %v910 = vpow.pop %v909
    %v911 = vadd.f32 %v910, 1.0
    %v912 = vrcp.pop %v911
    %v913 = vmul.f32 %v911, %v912
    %v914 = vsub.f32 1.0, %v913
    %v915 = vmul.f32 %v912, %v914
    %v916 = vadd.f32 %v912, %v915
    %vm917 = vweird.f32 %v911
    %vm918 = vweird.f32 %v912
    %vm919 = vmor %vm917, %vm918
    %v920 = vsel %vm919, %v912, %v916
    %v921 = vand.u32 2147483647, %v911
    %vm922 = vcmp.eq.f32.partialorder %v921, 8.507059e+37
    %v923 = vand.u32 %v911, 2147483648
    %v924 = vor.u32 1.1754944e-38, %v923
    %v925 = vsel %vm922, %v924, %v920
    %v926 = vmul.f32 1.0, %v925
    %v927 = vtanh.pop %v907
    %v929 = vrot.slane %v867, 7
    %v931 = vmul.f32 %v926, %v929
    %933 = vrot.lane.b32.xlu0 %v927, 64
    %v934 = vpop.permute.xlu0 %933
    %v936 = vmul.f32 %v926, %v934
    %938 = vrot.lane.b32.xlu0 %v936, 32
    %v939 = vpop.permute.xlu0 %938
    %v941 = vadd.f32 %v931, %v939
    %v942 = vtanh.pop %v941
    %944 = vrot.lane.b32.xlu0 %v942, 64
    %v945 = vpop.permute.xlu0 %944
    %v947 = vmul.f32 %v926, %v945
    %949 = vrot.lane.b32.xlu0 %v947, 32
    %v950 = vpop.permute.xlu0 %949
    %952 = vst.msk [vmem:[#allocation2] sm:$0x4] %vm332, %v950
    %v953 = vrot.slane %v947, 2
    %954 = vrot.lane.b32.xlu0 %v953, 32
    %v955 = vpop.permute.xlu0 %954
    %v956 = vsel %vm96, %v955, 0
    %958 = vmatpush.msra.mxu0 0.0
    %959 = vmatpush.msra.mxu0 0.0
    %960 = vmatpush.msra.mxu0 0.0
    %961 = vmatpush.msra.mxu0 0.0
    %962 = vmatpush.msra.mxu0 0.0
    %963 = vmatpush.msra.mxu0 0.0
    %964 = vmatpush.msra.mxu0 0.0
    %965 = vmatpush.msra.mxu0 0.0
    %966 = vmatpush.msra.mxu0 0.0
    %967 = vmatpush.msra.mxu0 0.0
    %968 = vmatpush.msra.mxu0 0.0
    %969 = vmatpush.msra.mxu0 0.0
    %970 = vmatpush.msra.mxu0 %v719
    %971 = vmatpush.msra.mxu0 %v718
    %972 = vmatpush.msra.mxu0 %v717
    %973 = vmatpush.msra.mxu0 %v716
    %974 = vmatmul.f32.gmra.mxu0 %v956
    %v975 = vpop.f32.mrf.mxu0
    %v976 = vadd.f32 0.0, %v975
    %977 = vdwg.mxu0
    %v979 = vrot.slane %v976, 5
    %v981 = vadd.f32 %v743, %v979
    %v982 = vxor.u32 %v981, 2147483648
    %v983 = vmul.f32 %v982, 1.442695
    %v984 = vpow.pop %v983
    %v985 = vadd.f32 %v984, 1.0
    %v986 = vrcp.pop %v985
    %v987 = vmul.f32 %v985, %v986
    %v988 = vsub.f32 1.0, %v987
    %v989 = vmul.f32 %v986, %v988
    %v990 = vadd.f32 %v986, %v989
    %vm991 = vweird.f32 %v985
    %vm992 = vweird.f32 %v986
    %vm993 = vmor %vm991, %vm992
    %v994 = vsel %vm993, %v986, %v990
    %v995 = vand.u32 2147483647, %v985
    %vm996 = vcmp.eq.f32.partialorder %v995, 8.507059e+37
    %v997 = vand.u32 %v985, 2147483648
    %v998 = vor.u32 1.1754944e-38, %v997
    %v999 = vsel %vm996, %v998, %v994
    %v1000 = vmul.f32 1.0, %v999
    %v1001 = vtanh.pop %v981
    %v1003 = vrot.slane %v941, 7
    %v1005 = vmul.f32 %v1000, %v1003
    %1007 = vrot.lane.b32.xlu0 %v1001, 64
    %v1008 = vpop.permute.xlu0 %1007
    %v1010 = vmul.f32 %v1000, %v1008
    %1012 = vrot.lane.b32.xlu0 %v1010, 32
    %v1013 = vpop.permute.xlu0 %1012
    %v1015 = vadd.f32 %v1005, %v1013
    %v1016 = vtanh.pop %v1015
    %1018 = vrot.lane.b32.xlu0 %v1016, 64
    %v1019 = vpop.permute.xlu0 %1018
    %v1021 = vmul.f32 %v1000, %v1019
    %1023 = vrot.lane.b32.xlu0 %v1021, 32
    %v1024 = vpop.permute.xlu0 %1023
    %1026 = vst.msk [vmem:[#allocation2] sm:$0x8] %vm407, %v1024
    %v1027 = vrot.slane %v1021, 3
    %1028 = vrot.lane.b32.xlu0 %v1027, 32
    %v1029 = vpop.permute.xlu0 %1028
    %v1030 = vsel %vm96, %v1029, 0
    %1032 = vmatpush.msra.mxu0 0.0
    %1033 = vmatpush.msra.mxu0 0.0
    %1034 = vmatpush.msra.mxu0 0.0
    %1035 = vmatpush.msra.mxu0 0.0
    %1036 = vmatpush.msra.mxu0 0.0
    %1037 = vmatpush.msra.mxu0 0.0
    %1038 = vmatpush.msra.mxu0 0.0
    %1039 = vmatpush.msra.mxu0 0.0
    %1040 = vmatpush.msra.mxu0 0.0
    %1041 = vmatpush.msra.mxu0 0.0
    %1042 = vmatpush.msra.mxu0 0.0
    %1043 = vmatpush.msra.mxu0 0.0
    %1044 = vmatpush.msra.mxu0 %v719
    %1045 = vmatpush.msra.mxu0 %v718
    %1046 = vmatpush.msra.mxu0 %v717
    %1047 = vmatpush.msra.mxu0 %v716
    %1048 = vmatmul.f32.gmra.mxu0 %v1030
    %v1049 = vpop.f32.mrf.mxu0
    %v1050 = vadd.f32 0.0, %v1049
    %1051 = vdwg.mxu0
    %v1053 = vrot.slane %v1050, 4
    %v1055 = vadd.f32 %v743, %v1053
    %v1056 = vxor.u32 %v1055, 2147483648
    %v1057 = vmul.f32 %v1056, 1.442695
    %v1058 = vpow.pop %v1057
    %v1059 = vadd.f32 %v1058, 1.0
    %v1060 = vrcp.pop %v1059
    %v1061 = vmul.f32 %v1059, %v1060
    %v1062 = vsub.f32 1.0, %v1061
    %v1063 = vmul.f32 %v1060, %v1062
    %v1064 = vadd.f32 %v1060, %v1063
    %vm1065 = vweird.f32 %v1059
    %vm1066 = vweird.f32 %v1060
    %vm1067 = vmor %vm1065, %vm1066
    %v1068 = vsel %vm1067, %v1060, %v1064
    %v1069 = vand.u32 2147483647, %v1059
    %vm1070 = vcmp.eq.f32.partialorder %v1069, 8.507059e+37
    %v1071 = vand.u32 %v1059, 2147483648
    %v1072 = vor.u32 1.1754944e-38, %v1071
    %v1073 = vsel %vm1070, %v1072, %v1068
    %v1074 = vmul.f32 1.0, %v1073
    %v1075 = vtanh.pop %v1055
    %v1077 = vrot.slane %v1015, 7
    %v1079 = vmul.f32 %v1074, %v1077
    %1081 = vrot.lane.b32.xlu0 %v1075, 64
    %v1082 = vpop.permute.xlu0 %1081
    %v1084 = vmul.f32 %v1074, %v1082
    %1086 = vrot.lane.b32.xlu0 %v1084, 32
    %v1087 = vpop.permute.xlu0 %1086
    %v1089 = vadd.f32 %v1079, %v1087
    %v1090 = vtanh.pop %v1089
    %1092 = vrot.lane.b32.xlu0 %v1090, 64
    %v1093 = vpop.permute.xlu0 %1092
    %v1095 = vmul.f32 %v1074, %v1093
    %1097 = vrot.lane.b32.xlu0 %v1095, 32
    %v1098 = vpop.permute.xlu0 %1097
    %1100 = vst.msk [vmem:[#allocation2] sm:$0x10] %vm482, %v1098
    %v1101 = vrot.slane %v1095, 4
    %1102 = vrot.lane.b32.xlu0 %v1101, 32
    %v1103 = vpop.permute.xlu0 %1102
    %v1104 = vsel %vm96, %v1103, 0
    %1106 = vmatpush.msra.mxu0 0.0
    %1107 = vmatpush.msra.mxu0 0.0
    %1108 = vmatpush.msra.mxu0 0.0
    %1109 = vmatpush.msra.mxu0 0.0
    %1110 = vmatpush.msra.mxu0 0.0
    %1111 = vmatpush.msra.mxu0 0.0
    %1112 = vmatpush.msra.mxu0 0.0
    %1113 = vmatpush.msra.mxu0 0.0
    %1114 = vmatpush.msra.mxu0 0.0
    %1115 = vmatpush.msra.mxu0 0.0
    %1116 = vmatpush.msra.mxu0 0.0
    %1117 = vmatpush.msra.mxu0 0.0
    %1118 = vmatpush.msra.mxu0 %v719
    %1119 = vmatpush.msra.mxu0 %v718
    %1120 = vmatpush.msra.mxu0 %v717
    %1121 = vmatpush.msra.mxu0 %v716
    %1122 = vmatmul.f32.gmra.mxu0 %v1104
    %v1123 = vpop.f32.mrf.mxu0
    %v1124 = vadd.f32 0.0, %v1123
    %1125 = vdwg.mxu0
    %v1127 = vrot.slane %v1124, 3
    %v1129 = vadd.f32 %v743, %v1127
    %v1130 = vxor.u32 %v1129, 2147483648
    %v1131 = vmul.f32 %v1130, 1.442695
    %v1132 = vpow.pop %v1131
    %v1133 = vadd.f32 %v1132, 1.0
    %v1134 = vrcp.pop %v1133
    %v1135 = vmul.f32 %v1133, %v1134
    %v1136 = vsub.f32 1.0, %v1135
    %v1137 = vmul.f32 %v1134, %v1136
    %v1138 = vadd.f32 %v1134, %v1137
    %vm1139 = vweird.f32 %v1133
    %vm1140 = vweird.f32 %v1134
    %vm1141 = vmor %vm1139, %vm1140
    %v1142 = vsel %vm1141, %v1134, %v1138
    %v1143 = vand.u32 2147483647, %v1133
    %vm1144 = vcmp.eq.f32.partialorder %v1143, 8.507059e+37
    %v1145 = vand.u32 %v1133, 2147483648
    %v1146 = vor.u32 1.1754944e-38, %v1145
    %v1147 = vsel %vm1144, %v1146, %v1142
    %v1148 = vmul.f32 1.0, %v1147
    %v1149 = vtanh.pop %v1129
    %v1151 = vrot.slane %v1089, 7
    %v1153 = vmul.f32 %v1148, %v1151
    %1155 = vrot.lane.b32.xlu0 %v1149, 64
    %v1156 = vpop.permute.xlu0 %1155
    %v1158 = vmul.f32 %v1148, %v1156
    %1160 = vrot.lane.b32.xlu0 %v1158, 32
    %v1161 = vpop.permute.xlu0 %1160
    %v1163 = vadd.f32 %v1153, %v1161
    %v1164 = vtanh.pop %v1163
    %1166 = vrot.lane.b32.xlu0 %v1164, 64
    %v1167 = vpop.permute.xlu0 %1166
    %v1169 = vmul.f32 %v1148, %v1167
    %1171 = vrot.lane.b32.xlu0 %v1169, 32
    %v1172 = vpop.permute.xlu0 %1171
    %1174 = vst.msk [vmem:[#allocation2] sm:$0x20] %vm557, %v1172
    %v1175 = vrot.slane %v1169, 5
    %1176 = vrot.lane.b32.xlu0 %v1175, 32
    %v1177 = vpop.permute.xlu0 %1176
    %v1178 = vsel %vm96, %v1177, 0
    %1180 = vmatpush.msra.mxu0 0.0
    %1181 = vmatpush.msra.mxu0 0.0
    %1182 = vmatpush.msra.mxu0 0.0
    %1183 = vmatpush.msra.mxu0 0.0
    %1184 = vmatpush.msra.mxu0 0.0
    %1185 = vmatpush.msra.mxu0 0.0
    %1186 = vmatpush.msra.mxu0 0.0
    %1187 = vmatpush.msra.mxu0 0.0
    %1188 = vmatpush.msra.mxu0 0.0
    %1189 = vmatpush.msra.mxu0 0.0
    %1190 = vmatpush.msra.mxu0 0.0
    %1191 = vmatpush.msra.mxu0 0.0
    %1192 = vmatpush.msra.mxu0 %v719
    %1193 = vmatpush.msra.mxu0 %v718
    %1194 = vmatpush.msra.mxu0 %v717
    %1195 = vmatpush.msra.mxu0 %v716
    %1196 = vmatmul.f32.gmra.mxu0 %v1178
    %v1197 = vpop.f32.mrf.mxu0
    %v1198 = vadd.f32 0.0, %v1197
    %1199 = vdwg.mxu0
    %v1201 = vrot.slane %v1198, 2
    %v1203 = vadd.f32 %v743, %v1201
    %v1204 = vxor.u32 %v1203, 2147483648
    %v1205 = vmul.f32 %v1204, 1.442695
    %v1206 = vpow.pop %v1205
    %v1207 = vadd.f32 %v1206, 1.0
    %v1208 = vrcp.pop %v1207
    %v1209 = vmul.f32 %v1207, %v1208
    %v1210 = vsub.f32 1.0, %v1209
    %v1211 = vmul.f32 %v1208, %v1210
    %v1212 = vadd.f32 %v1208, %v1211
    %vm1213 = vweird.f32 %v1207
    %vm1214 = vweird.f32 %v1208
    %vm1215 = vmor %vm1213, %vm1214
    %v1216 = vsel %vm1215, %v1208, %v1212
    %v1217 = vand.u32 2147483647, %v1207
    %vm1218 = vcmp.eq.f32.partialorder %v1217, 8.507059e+37
    %v1219 = vand.u32 %v1207, 2147483648
    %v1220 = vor.u32 1.1754944e-38, %v1219
    %v1221 = vsel %vm1218, %v1220, %v1216
    %v1222 = vmul.f32 1.0, %v1221
    %v1223 = vtanh.pop %v1203
    %v1225 = vrot.slane %v1163, 7
    %v1227 = vmul.f32 %v1222, %v1225
    %1229 = vrot.lane.b32.xlu0 %v1223, 64
    %v1230 = vpop.permute.xlu0 %1229
    %v1232 = vmul.f32 %v1222, %v1230
    %1234 = vrot.lane.b32.xlu0 %v1232, 32
    %v1235 = vpop.permute.xlu0 %1234
    %v1237 = vadd.f32 %v1227, %v1235
    %v1238 = vtanh.pop %v1237
    %1240 = vrot.lane.b32.xlu0 %v1238, 64
    %v1241 = vpop.permute.xlu0 %1240
    %v1243 = vmul.f32 %v1222, %v1241
    %1245 = vrot.lane.b32.xlu0 %v1243, 32
    %v1246 = vpop.permute.xlu0 %1245
    %1248 = vst.msk [vmem:[#allocation2] sm:$0x40] %vm632, %v1246
    %v1249 = vrot.slane %v1243, 6
    %1250 = vrot.lane.b32.xlu0 %v1249, 32
    %v1251 = vpop.permute.xlu0 %1250
    %v1252 = vsel %vm96, %v1251, 0
    %1254 = vmatpush.msra.mxu0 0.0
    %1255 = vmatpush.msra.mxu0 0.0
    %1256 = vmatpush.msra.mxu0 0.0
    %1257 = vmatpush.msra.mxu0 0.0
    %1258 = vmatpush.msra.mxu0 0.0
    %1259 = vmatpush.msra.mxu0 0.0
    %1260 = vmatpush.msra.mxu0 0.0
    %1261 = vmatpush.msra.mxu0 0.0
    %1262 = vmatpush.msra.mxu0 0.0
    %1263 = vmatpush.msra.mxu0 0.0
    %1264 = vmatpush.msra.mxu0 0.0
    %1265 = vmatpush.msra.mxu0 0.0
    %1266 = vmatpush.msra.mxu0 %v719
    %1267 = vmatpush.msra.mxu0 %v718
    %1268 = vmatpush.msra.mxu0 %v717
    %1269 = vmatpush.msra.mxu0 %v716
    %1270 = vmatmul.f32.gmra.mxu0 %v1252
    %v1271 = vpop.f32.mrf.mxu0
    %v1272 = vadd.f32 0.0, %v1271
    %1273 = vdwg.mxu0
    %v1275 = vrot.slane %v1272, 1
    %v1277 = vadd.f32 %v743, %v1275
    %v1278 = vxor.u32 %v1277, 2147483648
    %v1279 = vmul.f32 %v1278, 1.442695
    %v1280 = vpow.pop %v1279
    %v1281 = vadd.f32 %v1280, 1.0
    %v1282 = vrcp.pop %v1281
    %v1283 = vmul.f32 %v1281, %v1282
    %v1284 = vsub.f32 1.0, %v1283
    %v1285 = vmul.f32 %v1282, %v1284
    %v1286 = vadd.f32 %v1282, %v1285
    %vm1287 = vweird.f32 %v1281
    %vm1288 = vweird.f32 %v1282
    %vm1289 = vmor %vm1287, %vm1288
    %v1290 = vsel %vm1289, %v1282, %v1286
    %v1291 = vand.u32 2147483647, %v1281
    %vm1292 = vcmp.eq.f32.partialorder %v1291, 8.507059e+37
    %v1293 = vand.u32 %v1281, 2147483648
    %v1294 = vor.u32 1.1754944e-38, %v1293
    %v1295 = vsel %vm1292, %v1294, %v1290
    %v1296 = vmul.f32 1.0, %v1295
    %v1297 = vtanh.pop %v1277
    %v1299 = vrot.slane %v1237, 7
    %v1301 = vmul.f32 %v1296, %v1299
    %1303 = vrot.lane.b32.xlu0 %v1297, 64
    %v1304 = vpop.permute.xlu0 %1303
    %v1306 = vmul.f32 %v1296, %v1304
    %1308 = vrot.lane.b32.xlu0 %v1306, 32
    %v1309 = vpop.permute.xlu0 %1308
    %v1311 = vadd.f32 %v1301, %v1309
    %v1312 = vtanh.pop %v1311
    %1314 = vrot.lane.b32.xlu0 %v1312, 64
    %v1315 = vpop.permute.xlu0 %1314
    %v1317 = vmul.f32 %v1296, %v1315
    %1319 = vrot.lane.b32.xlu0 %v1317, 32
    %v1320 = vpop.permute.xlu0 %1319
    %1322 = vst.msk [vmem:[#allocation2] sm:$0x80] %vm707, %v1320
    %v1323 = vld [vmem:[#allocation2] sm:$0xff]
    %v1324 = vld [vmem:[#allocation9] sm:$0xff]
    %v1325 = vld [vmem:[#allocation9 + $0x8] sm:$0xff]
    %v1326 = vld [vmem:[#allocation9 + $0x10] sm:$0xff]
    %v1327 = vld [vmem:[#allocation9 + $0x18] sm:$0xff]
    %v1328 = vld [vmem:[%s5] sm:$0x1]
    %v1330 = vperm.slane %v1328, 0
    %v1333 = vsel %vm96, %v1323, 0
    %1335 = vmatpush.msra.mxu0 0.0
    %1336 = vmatpush.msra.mxu0 0.0
    %1337 = vmatpush.msra.mxu0 0.0
    %1338 = vmatpush.msra.mxu0 0.0
    %1339 = vmatpush.msra.mxu0 0.0
    %1340 = vmatpush.msra.mxu0 0.0
    %1341 = vmatpush.msra.mxu0 0.0
    %1342 = vmatpush.msra.mxu0 0.0
    %1343 = vmatpush.msra.mxu0 0.0
    %1344 = vmatpush.msra.mxu0 0.0
    %1345 = vmatpush.msra.mxu0 0.0
    %1346 = vmatpush.msra.mxu0 0.0
    %1347 = vmatpush.msra.mxu0 %v1327
    %1348 = vmatpush.msra.mxu0 %v1326
    %1349 = vmatpush.msra.mxu0 %v1325
    %1350 = vmatpush.msra.mxu0 %v1324
    %1351 = vmatmul.f32.gmra.mxu0 %v1333
    %v1352 = vpop.f32.mrf.mxu0
    %v1353 = vadd.f32 %v1330, %v1352
    %1354 = vdwg.mxu0
    %1355 = vst [vmem:[#allocation11] sm:$0xff] %v1353
    // Predicated region
    $region42: #{tpu_custom_call.1} parent=1 // pred_check
      _
    $region43: #{tpu_custom_call.1} parent=1 // pred_check_branch
      %1357 = sbr.rel (0) target = $region45
    $region44: #{tpu_custom_call.1} parent=1 // pred_region
      %1359 = vsyncadd [#allocation5], 0
      %s1361 = sshll.u32 [#allocation11], 4
      %s1362 = int_to_ptr.vmem [resolvable:$true] %s1361
      %s1363 = sshll.u32 %s6, 4
      %s1364 = int_to_ptr.hbm [resolvable:$true] %s1363
      %1366 = dma.vmem_to_hbm [thread:$0]  %s1362, 128, %s1364, [#allocation5]
    $region45: #{tpu_custom_call.1} parent=1 // pred_fallthru
      _
    // Predicated region
    $region46: #{tpu_custom_call.1} parent=1 // pred_check
      _
    $region47: #{tpu_custom_call.1} parent=1 // pred_check_branch
      %1368 = sbr.rel (0) target = $region49
    $region48: #{tpu_custom_call.1} parent=1 // pred_region
      %1370 = dma.done [#allocation5], 128
    $region49: #{tpu_custom_call.1} parent=1 // pred_fallthru
      _
    %1371 = vsyncpa [#allocation4], 1
    %1372 = vsyncpa [#allocation7], 1
    %1373 = vsyncpa [#allocation10], 1
    %1374 = vsyncpa [#allocation5], 1

</llo_original>
